<compile_context>
chip_gen: v6e
topology: v6e:2x2x1
jax: 0.10.0
libtpu: 0.0.40
codegen_flags: <defaults>
</compile_context>

<pallas_src>
import functools

import jax
import jax.numpy as jnp
from jax import lax
from jax.experimental import pallas as pl
from jax.experimental.pallas import tpu as pltpu

K1, STRIDE1 = 5, 3   # conv1 kernel / stride
K2 = 2               # conv2 kernel (stride 1)
POOL = 3             # max_pool1d kernel (stride defaults to kernel_size)

# Max samples per grid step. Live f32 intermediates are ~8 KB/sample at (L1=16, H=32), so
# TB=512 is ~5-6 MiB of VMEM -- safe under v7x's 32 MiB scoped default (more headroom on v5e/v6e).
TB_MAX = 512


def _cnn_kernel(p_ref, w1_ref, b1_ref, w2_ref, b2_ref, wfc_ref, bfc_ref, out_ref,
                *, TB, L1, n_pool):
    H = w1_ref.shape[1]
    N = TB * L1

    # ---- conv1: one matmul over all TB*L1 im2col rows (batch folded into M)
    h1 = jnp.dot(p_ref[...], w1_ref[...], preferred_element_type=jnp.float32)
    h1 = jnp.maximum(h1 + b1_ref[...], 0.0)                           # (N, H)

    # ---- conv2 (k=2, s=1): fuse the two shifted dots into ONE matmul against (2H, H).
    # Row t is paired with row t+1 via an XLU sublane rotation (roll by N-1 == shift of -1).
    # Rows crossing a sample boundary (t == L1-1 within each sample, incl. the wraparound row)
    # are garbage but are never read by the pooling below (POOL * n_pool <= L1 - 1).
    h1_next = pltpu.roll(h1, shift=N - 1, axis=0)                     # row t -> h1[t+1]
    x2 = jnp.concatenate([h1, h1_next], axis=-1)                      # (N, 2H)
    h2 = jnp.dot(x2, w2_ref[...], preferred_element_type=jnp.float32) + b2_ref[...]
    h2 = jnp.maximum(h2, 0.0)                                         # (N, H)

    # ---- maxpool(3,3): one reshaped max-reduce over the whole batch tile, p-major flatten,
    # then a single (TB, n_pool*H) @ (n_pool*H, n_classes) FC matmul.
    h2 = h2.reshape(TB, L1, H)[:, :POOL * n_pool, :]                  # (TB, POOL*n_pool, H)
    pooled = jnp.max(h2.reshape(TB, n_pool, POOL, H), axis=2)         # (TB, n_pool, H)
    flat = pooled.reshape(TB, n_pool * H)                             # flat[p*H + co]
    out_ref[...] = (jnp.dot(flat, wfc_ref[...], preferred_element_type=jnp.float32)
                    + bfc_ref[...])                                   # (TB, n_classes)


def _pick_batch_tile(B):
    """Pick (TB, B_pad): large 8-aligned batch tiles, and >= 2 grid steps whenever B > 1
    so dimension_semantics=("parallel",) can shard across both v7x TensorCores."""
    if B == 1:
        return 1, 1
    half = -(-B // 2)                               # ceil(B / 2)
    TB = min(TB_MAX, ((half + 7) // 8) * 8)         # 8-sample-aligned tiles
    B_pad = ((B + TB - 1) // TB) * TB
    if B_pad // TB < 2:                             # guarantee at least 2 grid steps
        B_pad = 2 * TB
    return TB, B_pad


def cnn_forward(x, params):
    W1, b1, W2, b2, Wfc, bfc = params
    B, Cin, L = x.shape
    H = W1.shape[0]
    n_classes = Wfc.shape[0]
    L1 = (L - K1) // STRIDE1 + 1
    L2 = L1 - K2 + 1
    n_pool = L2 // POOL

    # Invariants the fused (roll-based) conv2 + pooling epilogue relies on:
    assert K2 == 2 and W2.shape[2] == K2, "kernel is specialized to conv2 kernel_size=2"
    assert L2 == L1 - 1 and POOL * n_pool <= L2, "pool must never read the per-sample wrap row"

    TB, B_pad = _pick_batch_tile(B)
    if B_pad != B:
        x = jnp.pad(x, ((0, B_pad - B), (0, 0), (0, 0)))

    # im2col for conv1 (host-side layout glue, plain JAX).
    # Further step: do the im2col in-kernel from raw x to remove the ~1.6x HBM expansion.
    idx = STRIDE1 * jnp.arange(L1)[:, None] + jnp.arange(K1)[None, :]     # (L1, K1)
    patches = x[:, :, idx]                                                # (B_pad, Cin, L1, K1)
    patches = patches.transpose(0, 2, 1, 3).reshape(B_pad * L1, Cin * K1)

    # weight re-layouts (glue)
    w1_mat = jnp.transpose(W1, (1, 2, 0)).reshape(Cin * K1, H)            # [ci*K1+k, co]
    w2_cat = jnp.concatenate([W2[:, :, 0].T, W2[:, :, 1].T], axis=0)      # (2H, H)
    # PyTorch flatten order after pool is channel-major: flat[co*n_pool + p];
    # kernel flat order is p-major: flat[p*H + co] -> reorder the FC weight accordingly.
    wfc_flat = (Wfc.reshape(n_classes, H, n_pool)
                   .transpose(2, 1, 0)                                    # (n_pool, H, n_classes)
                   .reshape(n_pool * H, n_classes))

    kernel = functools.partial(_cnn_kernel, TB=TB, L1=L1, n_pool=n_pool)

    out = pl.pallas_call(
        kernel,
        out_shape=jax.ShapeDtypeStruct((B_pad, n_classes), jnp.float32),
        grid=(B_pad // TB,),
        in_specs=[
            pl.BlockSpec((TB * L1, Cin * K1), lambda i: (i, 0)),
            pl.BlockSpec((Cin * K1, H), lambda i: (0, 0)),
            pl.BlockSpec((1, H), lambda i: (0, 0)),
            pl.BlockSpec((2 * H, H), lambda i: (0, 0)),
            pl.BlockSpec((1, H), lambda i: (0, 0)),
            pl.BlockSpec((n_pool * H, n_classes), lambda i: (0, 0)),
            pl.BlockSpec((1, n_classes), lambda i: (0, 0)),
        ],
        out_specs=pl.BlockSpec((TB, n_classes), lambda i: (i, 0)),
        compiler_params=pltpu.CompilerParams(
            dimension_semantics=("parallel",),
            vmem_limit_bytes=32 * 1024 * 1024,
        ),
    )(patches, w1_mat, b1.reshape(1, H), w2_cat, b2.reshape(1, H),
      wfc_flat, bfc.reshape(1, n_classes))
    return out[:B]


def cnn_reference(x, params):
    """Pure-JAX reference matching the PyTorch forward exactly."""
    W1, b1, W2, b2, Wfc, bfc = params
    dn = ('NCH', 'OIH', 'NCH')
    y = lax.conv_general_dilated(x, W1, window_strides=(STRIDE1,),
                                 padding='VALID', dimension_numbers=dn)
    y = jnp.maximum(y + b1[None, :, None], 0.0)
    y = lax.conv_general_dilated(y, W2, window_strides=(1,),
                                 padding='VALID', dimension_numbers=dn)
    y = jnp.maximum(y + b2[None, :, None], 0.0)
    B, C, L2 = y.shape
    n_pool = L2 // POOL
    y = y[:, :, :n_pool * POOL].reshape(B, C, n_pool, POOL).max(axis=-1)
    y = y.reshape(B, C * n_pool)
    return y @ Wfc.T + bfc


if __name__ == "__main__":
    # num_features=4, hidden_layer=32, layer_num=2, num_classes=3
    # seq length L=50 so that: conv1 -> 16, conv2 -> 15, maxpool(3) -> 5
    # which matches multiples[layer_num-1] == 5 used by fc1.
    Cin, L = 4, 50
    H, n_classes = 32, 3

    key = jax.random.PRNGKey(0)
    ks = jax.random.split(key, 8)

    def u(k, shape, fan_in):
        bound = 1.0 / jnp.sqrt(float(fan_in))
        return jax.random.uniform(k, shape, jnp.float32, -bound, bound)

    L1 = (L - K1) // STRIDE1 + 1
    L2 = L1 - K2 + 1
    n_pool = L2 // POOL

    W1 = u(ks[0], (H, Cin, K1), Cin * K1)                # conv1.weight
    b1 = u(ks[1], (H,), Cin * K1)                        # conv1.bias
    W2 = u(ks[2], (H, H, K2), H * K2)                    # convs[0].weight
    b2 = u(ks[3], (H,), H * K2)                          # convs[0].bias
    Wfc = u(ks[4], (n_classes, H * n_pool), H * n_pool)  # fc1.weight
    bfc = u(ks[5], (n_classes,), H * n_pool)             # fc1.bias
    params = (W1, b1, W2, b2, Wfc, bfc)

    # Small batch (module's nominal use).
    x_small = jax.random.normal(ks[6], (2, Cin, L), jnp.float32)
    out = jax.block_until_ready(cnn_forward(x_small, params))
    ref = cnn_reference(x_small, params)
    assert out.shape == (2, n_classes), out.shape
    assert jnp.allclose(out, ref, atol=1e-4, rtol=1e-4), (out, ref)

    # Larger, non-tile-aligned batch: exercises batch padding + the multi-step "parallel" grid.
    x_big = jax.random.normal(ks[7], (37, Cin, L), jnp.float32)
    out_b = jax.block_until_ready(cnn_forward(x_big, params))
    ref_b = cnn_reference(x_big, params)
    assert out_b.shape == (37, n_classes), out_b.shape
    assert jnp.allclose(out_b, ref_b, atol=1e-4, rtol=1e-4), (out_b, ref_b)

    print("KERNEL_OK")
</pallas_src>

<mosaic_0001>
module attributes {stable_mosaic.version = 11 : i64} {
  func.func @_cnn_kernel(%arg0: i32, %arg1: memref<128x20xf32, #tpu.memory_space<vmem>>, %arg2: memref<20x32xf32, #tpu.memory_space<vmem>>, %arg3: memref<1x32xf32, #tpu.memory_space<vmem>>, %arg4: memref<64x32xf32, #tpu.memory_space<vmem>>, %arg5: memref<1x32xf32, #tpu.memory_space<vmem>>, %arg6: memref<160x3xf32, #tpu.memory_space<vmem>>, %arg7: memref<1x3xf32, #tpu.memory_space<vmem>>, %arg8: memref<8x3xf32, #tpu.memory_space<vmem>>) attributes {dimension_semantics = [#tpu.dimension_semantics<parallel>], iteration_bounds = array<i64: 2>, scalar_prefetch = 0 : i64, scratch_operands = 0 : i64, tpu.core_type = #tpu.core_type<tc>, window_params = [{transform_indices = @transform_0, window_bounds = array<i64: 128, 20>}, {pipeline_mode = #tpu.pipeline_mode<synchronous>, transform_indices = @transform_1, window_bounds = array<i64: 20, 32>}, {pipeline_mode = #tpu.pipeline_mode<synchronous>, transform_indices = @transform_2, window_bounds = array<i64: 1, 32>}, {pipeline_mode = #tpu.pipeline_mode<synchronous>, transform_indices = @transform_3, window_bounds = array<i64: 64, 32>}, {pipeline_mode = #tpu.pipeline_mode<synchronous>, transform_indices = @transform_4, window_bounds = array<i64: 1, 32>}, {pipeline_mode = #tpu.pipeline_mode<synchronous>, transform_indices = @transform_5, window_bounds = array<i64: 160, 3>}, {pipeline_mode = #tpu.pipeline_mode<synchronous>, transform_indices = @transform_6, window_bounds = array<i64: 1, 3>}, {transform_indices = @transform_7, window_bounds = array<i64: 8, 3>}]} {
    %c0 = arith.constant 0 : index
    %c0_0 = arith.constant 0 : index
    %0 = vector.load %arg1[%c0, %c0_0] : memref<128x20xf32, #tpu.memory_space<vmem>>, vector<128x20xf32>
    %c0_1 = arith.constant 0 : index
    %c0_2 = arith.constant 0 : index
    %1 = vector.load %arg2[%c0_1, %c0_2] : memref<20x32xf32, #tpu.memory_space<vmem>>, vector<20x32xf32>
    %cst = arith.constant dense<0.000000e+00> : vector<128x32xf32>
    %2 = tpu.matmul %0, %1, %cst {dimension_numbers = #tpu.dot_dimension_numbers<[1], [0], [0], [1], [0, 0, 1, 1], [], []>} : vector<128x20xf32>, vector<20x32xf32>, vector<128x32xf32> -> vector<128x32xf32>
    %c0_3 = arith.constant 0 : index
    %c0_4 = arith.constant 0 : index
    %3 = vector.load %arg3[%c0_3, %c0_4] : memref<1x32xf32, #tpu.memory_space<vmem>>, vector<1x32xf32>
    %4 = vector.broadcast %3 : vector<1x32xf32> to vector<128x32xf32>
    %5 = arith.addf %2, %4 : vector<128x32xf32>
    %cst_5 = arith.constant 0.000000e+00 : f32
    %6 = vector.broadcast %cst_5 : f32 to vector<128x32xf32>
    %7 = arith.maximumf %5, %6 : vector<128x32xf32>
    %c127_i32 = arith.constant 127 : i32
    %8 = tpu.dynamic_rotate %7 by %c127_i32 dim 0 : vector<128x32xf32>, i32 -> vector<128x32xf32>
    %9 = tpu.concatenate %7, %8 in 1 : vector<128x32xf32>, vector<128x32xf32> -> vector<128x64xf32>
    %c0_6 = arith.constant 0 : index
    %c0_7 = arith.constant 0 : index
    %10 = vector.load %arg4[%c0_6, %c0_7] : memref<64x32xf32, #tpu.memory_space<vmem>>, vector<64x32xf32>
    %cst_8 = arith.constant dense<0.000000e+00> : vector<128x32xf32>
    %11 = tpu.matmul %9, %10, %cst_8 {dimension_numbers = #tpu.dot_dimension_numbers<[1], [0], [0], [1], [0, 0, 1, 1], [], []>} : vector<128x64xf32>, vector<64x32xf32>, vector<128x32xf32> -> vector<128x32xf32>
    %c0_9 = arith.constant 0 : index
    %c0_10 = arith.constant 0 : index
    %12 = vector.load %arg5[%c0_9, %c0_10] : memref<1x32xf32, #tpu.memory_space<vmem>>, vector<1x32xf32>
    %13 = vector.broadcast %12 : vector<1x32xf32> to vector<128x32xf32>
    %14 = arith.addf %11, %13 : vector<128x32xf32>
    %cst_11 = arith.constant 0.000000e+00 : f32
    %15 = vector.broadcast %cst_11 : f32 to vector<128x32xf32>
    %16 = arith.maximumf %14, %15 : vector<128x32xf32>
    %17 = vector.shape_cast %16 : vector<128x32xf32> to vector<8x16x32xf32>
    %18 = vector.extract_strided_slice %17 {offsets = [0, 0, 0], sizes = [8, 15, 32], strides = [1, 1, 1]} : vector<8x16x32xf32> to vector<8x15x32xf32>
    %19 = vector.shape_cast %18 : vector<8x15x32xf32> to vector<8x5x3x32xf32>
    %cst_12 = arith.constant dense<0xFF800000> : vector<8x5x32xf32>
    %20 = vector.multi_reduction <maximumf>, %19, %cst_12 [2] : vector<8x5x3x32xf32> to vector<8x5x32xf32>
    %21 = vector.shape_cast %20 : vector<8x5x32xf32> to vector<8x160xf32>
    %c0_13 = arith.constant 0 : index
    %c0_14 = arith.constant 0 : index
    %22 = vector.load %arg6[%c0_13, %c0_14] : memref<160x3xf32, #tpu.memory_space<vmem>>, vector<160x3xf32>
    %cst_15 = arith.constant dense<0.000000e+00> : vector<8x3xf32>
    %23 = tpu.matmul %21, %22, %cst_15 {dimension_numbers = #tpu.dot_dimension_numbers<[1], [0], [0], [1], [0, 0, 1, 1], [], []>} : vector<8x160xf32>, vector<160x3xf32>, vector<8x3xf32> -> vector<8x3xf32>
    %c0_16 = arith.constant 0 : index
    %c0_17 = arith.constant 0 : index
    %24 = vector.load %arg7[%c0_16, %c0_17] : memref<1x3xf32, #tpu.memory_space<vmem>>, vector<1x3xf32>
    %25 = vector.broadcast %24 : vector<1x3xf32> to vector<8x3xf32>
    %26 = arith.addf %23, %25 : vector<8x3xf32>
    %c0_18 = arith.constant 0 : index
    %c0_19 = arith.constant 0 : index
    %27 = vector.load %arg8[%c0_18, %c0_19] : memref<8x3xf32, #tpu.memory_space<vmem>>, vector<8x3xf32>
    tpu.vector_store %arg8[%c0_18, %c0_19], %26 {strides = array<i32>} : memref<8x3xf32, #tpu.memory_space<vmem>>, vector<8x3xf32>,
    return
  }
  func.func @transform_0(%arg0: i32) -> (i32, i32) {
    %c0_i32 = arith.constant 0 : i32
    %c0_i32_0 = arith.constant 0 : i32
    return %arg0, %c0_i32 : i32, i32
  }
  func.func @transform_1(%arg0: i32) -> (i32, i32) {
    %c0_i32 = arith.constant 0 : i32
    %c0_i32_0 = arith.constant 0 : i32
    %c0_i32_1 = arith.constant 0 : i32
    return %c0_i32, %c0_i32_0 : i32, i32
  }
  func.func @transform_2(%arg0: i32) -> (i32, i32) {
    %c0_i32 = arith.constant 0 : i32
    %c0_i32_0 = arith.constant 0 : i32
    %c0_i32_1 = arith.constant 0 : i32
    return %c0_i32, %c0_i32_0 : i32, i32
  }
  func.func @transform_3(%arg0: i32) -> (i32, i32) {
    %c0_i32 = arith.constant 0 : i32
    %c0_i32_0 = arith.constant 0 : i32
    %c0_i32_1 = arith.constant 0 : i32
    return %c0_i32, %c0_i32_0 : i32, i32
  }
  func.func @transform_4(%arg0: i32) -> (i32, i32) {
    %c0_i32 = arith.constant 0 : i32
    %c0_i32_0 = arith.constant 0 : i32
    %c0_i32_1 = arith.constant 0 : i32
    return %c0_i32, %c0_i32_0 : i32, i32
  }
  func.func @transform_5(%arg0: i32) -> (i32, i32) {
    %c0_i32 = arith.constant 0 : i32
    %c0_i32_0 = arith.constant 0 : i32
    %c0_i32_1 = arith.constant 0 : i32
    return %c0_i32, %c0_i32_0 : i32, i32
  }
  func.func @transform_6(%arg0: i32) -> (i32, i32) {
    %c0_i32 = arith.constant 0 : i32
    %c0_i32_0 = arith.constant 0 : i32
    %c0_i32_1 = arith.constant 0 : i32
    return %c0_i32, %c0_i32_0 : i32, i32
  }
  func.func @transform_7(%arg0: i32) -> (i32, i32) {
    %c0_i32 = arith.constant 0 : i32
    %c0_i32_0 = arith.constant 0 : i32
    return %arg0, %c0_i32 : i32, i32
  }
}

</mosaic_0001>

<llo_original>
// kernel: tpu_custom_call.1
$region0: #{tpu_custom_call.1}
  #allocation0 [shape = 'u32[]', space=smem, size = 0x4, offset = 0x4, fixed_abs, tag = 'smem constant byte address 0x4 - core index']
  #allocation1 [shape = 'u32[144,128]{1,0:T(1,128)}', space=vmem, size = 0x12000, scoped, tag = 'internal scratch']
  %s0 = inlined_call_operand.vmem [shape: f32[256,20], index: 0, kind: input, shape index: {}]
  %s1 = inlined_call_operand.vmem [shape: f32[20,32], index: 1, kind: input, shape index: {}]
  %s2 = inlined_call_operand.vmem [shape: f32[1,32], index: 2, kind: input, shape index: {}]
  %s3 = inlined_call_operand.vmem [shape: f32[64,32], index: 3, kind: input, shape index: {}]
  %s4 = inlined_call_operand.vmem [shape: f32[1,32], index: 4, kind: input, shape index: {}]
  %s5 = inlined_call_operand.vmem [shape: f32[160,3], index: 5, kind: input, shape index: {}]
  %s6 = inlined_call_operand.vmem [shape: f32[1,3], index: 6, kind: input, shape index: {}]
  %s7 = inlined_call_operand.vmem [shape: f32[16,3], index: 7, kind: output, shape index: {}]
  %s8 = sld [smem:[#allocation0]]
  $region61: #{tpu_custom_call.1} parent=0
    _
  %s10 = ssub.s32 1, %s8
  %s11 = scalar_select 0, %s10, %s8
  loop: start=0, step=1, limit=4
  $region2: #{tpu_custom_call.1} parent=0 // loop_pre_header
    _
  $region3: #{tpu_custom_call.1} parent=0 // loop_header
    %s13 = sphi 0, %s17
    %p14 = scmp.ge.s32.totalorder %s13, 4
    %s23 = sphi 0, %s25
    %s26 = sphi 0, %s23
    %s27 = sphi 0, %s26
    %s43 = sphi 0, %s27
    %s47 = sphi 0, %s47
    %s49 = sphi 0, %s47
    %s50 = sphi 0, %s49
    %s64 = sphi 0, %s50
    %s68 = sphi 0, %s68
    %s70 = sphi 0, %s68
    %s71 = sphi 0, %s70
    %s85 = sphi 0, %s71
    %s89 = sphi 0, %s89
    %s91 = sphi 0, %s89
    %s92 = sphi 0, %s91
    %s106 = sphi 0, %s92
    %s110 = sphi 0, %s110
    %s112 = sphi 0, %s110
    %s113 = sphi 0, %s112
    %s127 = sphi 0, %s113
    %s131 = sphi 0, %s131
    %s133 = sphi 0, %s131
    %s134 = sphi 0, %s133
    %s148 = sphi 0, %s134
    %s152 = sphi 0, %s152
    %s154 = sphi 0, %s152
    %s155 = sphi 0, %s154
    %s169 = sphi 0, %s155
    %s175 = sphi 0, %s177
    %s178 = sphi 0, %s175
    %s179 = sphi 0, %s178
    %s195 = sphi 0, %s179
  $region4: #{tpu_custom_call.1} parent=0 // loop_header_branch
    %16 = sbr.rel (%p14) target = $region8
  $region5: #{tpu_custom_call.1} parent=0 // loop_body
    %s18 = ssub.s32 %s13, 1
    %s19 = ssub.s32 %s13, 2
    %s20 = sadd.s32 %s13, 1
    %s21 = ssub.s32 %s13, %s20
    %p22 = scmp.eq.s32.totalorder %s21, 0
    %s24 = sadd.s32 %s23, 1
    %s25 = scalar_select %p22, %s23, %s24
    %p28 = pneg %p22
    %p29 = scmp.eq.s32.totalorder %s13, 1
    %p30 = por %p28, %p29
    %p31 = scmp.ne.s32.totalorder %s23, %s26
    %p32 = scmp.eq.s32.totalorder %s13, 0
    %p33 = por %p31, %p32
    %p34 = scmp.ne.s32.totalorder %s23, %s26
    %p35 = scmp.eq.s32.totalorder %s18, 1
    %p36 = por %p34, %p35
    %p37 = scmp.ne.s32.totalorder %s26, %s27
    %p38 = scmp.eq.s32.totalorder %s18, 0
    %p39 = por %p37, %p38
    %p40 = scmp.ne.s32.totalorder %s26, %s27
    %p41 = scmp.eq.s32.totalorder %s19, 1
    %p42 = por %p40, %p41
    %p44 = scmp.ne.s32.totalorder %s27, %s43
    %p45 = scmp.eq.s32.totalorder %s19, 0
    %p46 = por %p44, %p45
    %s48 = sadd.s32 %s47, 1
    %p51 = scmp.eq.s32.totalorder %s13, 1
    %p52 = scmp.ne.s32.totalorder %s47, %s49
    %p53 = scmp.eq.s32.totalorder %s13, 0
    %p54 = por %p52, %p53
    %p55 = scmp.ne.s32.totalorder %s47, %s49
    %p56 = scmp.eq.s32.totalorder %s18, 1
    %p57 = por %p55, %p56
    %p58 = scmp.ne.s32.totalorder %s49, %s50
    %p59 = scmp.eq.s32.totalorder %s18, 0
    %p60 = por %p58, %p59
    %p61 = scmp.ne.s32.totalorder %s49, %s50
    %p62 = scmp.eq.s32.totalorder %s19, 1
    %p63 = por %p61, %p62
    %p65 = scmp.ne.s32.totalorder %s50, %s64
    %p66 = scmp.eq.s32.totalorder %s19, 0
    %p67 = por %p65, %p66
    %s69 = sadd.s32 %s68, 1
    %p72 = scmp.eq.s32.totalorder %s13, 1
    %p73 = scmp.ne.s32.totalorder %s68, %s70
    %p74 = scmp.eq.s32.totalorder %s13, 0
    %p75 = por %p73, %p74
    %p76 = scmp.ne.s32.totalorder %s68, %s70
    %p77 = scmp.eq.s32.totalorder %s18, 1
    %p78 = por %p76, %p77
    %p79 = scmp.ne.s32.totalorder %s70, %s71
    %p80 = scmp.eq.s32.totalorder %s18, 0
    %p81 = por %p79, %p80
    %p82 = scmp.ne.s32.totalorder %s70, %s71
    %p83 = scmp.eq.s32.totalorder %s19, 1
    %p84 = por %p82, %p83
    %p86 = scmp.ne.s32.totalorder %s71, %s85
    %p87 = scmp.eq.s32.totalorder %s19, 0
    %p88 = por %p86, %p87
    %s90 = sadd.s32 %s89, 1
    %p93 = scmp.eq.s32.totalorder %s13, 1
    %p94 = scmp.ne.s32.totalorder %s89, %s91
    %p95 = scmp.eq.s32.totalorder %s13, 0
    %p96 = por %p94, %p95
    %p97 = scmp.ne.s32.totalorder %s89, %s91
    %p98 = scmp.eq.s32.totalorder %s18, 1
    %p99 = por %p97, %p98
    %p100 = scmp.ne.s32.totalorder %s91, %s92
    %p101 = scmp.eq.s32.totalorder %s18, 0
    %p102 = por %p100, %p101
    %p103 = scmp.ne.s32.totalorder %s91, %s92
    %p104 = scmp.eq.s32.totalorder %s19, 1
    %p105 = por %p103, %p104
    %p107 = scmp.ne.s32.totalorder %s92, %s106
    %p108 = scmp.eq.s32.totalorder %s19, 0
    %p109 = por %p107, %p108
    %s111 = sadd.s32 %s110, 1
    %p114 = scmp.eq.s32.totalorder %s13, 1
    %p115 = scmp.ne.s32.totalorder %s110, %s112
    %p116 = scmp.eq.s32.totalorder %s13, 0
    %p117 = por %p115, %p116
    %p118 = scmp.ne.s32.totalorder %s110, %s112
    %p119 = scmp.eq.s32.totalorder %s18, 1
    %p120 = por %p118, %p119
    %p121 = scmp.ne.s32.totalorder %s112, %s113
    %p122 = scmp.eq.s32.totalorder %s18, 0
    %p123 = por %p121, %p122
    %p124 = scmp.ne.s32.totalorder %s112, %s113
    %p125 = scmp.eq.s32.totalorder %s19, 1
    %p126 = por %p124, %p125
    %p128 = scmp.ne.s32.totalorder %s113, %s127
    %p129 = scmp.eq.s32.totalorder %s19, 0
    %p130 = por %p128, %p129
    %s132 = sadd.s32 %s131, 1
    %p135 = scmp.eq.s32.totalorder %s13, 1
    %p136 = scmp.ne.s32.totalorder %s131, %s133
    %p137 = scmp.eq.s32.totalorder %s13, 0
    %p138 = por %p136, %p137
    %p139 = scmp.ne.s32.totalorder %s131, %s133
    %p140 = scmp.eq.s32.totalorder %s18, 1
    %p141 = por %p139, %p140
    %p142 = scmp.ne.s32.totalorder %s133, %s134
    %p143 = scmp.eq.s32.totalorder %s18, 0
    %p144 = por %p142, %p143
    %p145 = scmp.ne.s32.totalorder %s133, %s134
    %p146 = scmp.eq.s32.totalorder %s19, 1
    %p147 = por %p145, %p146
    %p149 = scmp.ne.s32.totalorder %s134, %s148
    %p150 = scmp.eq.s32.totalorder %s19, 0
    %p151 = por %p149, %p150
    %s153 = sadd.s32 %s152, 1
    %p156 = scmp.eq.s32.totalorder %s13, 1
    %p157 = scmp.ne.s32.totalorder %s152, %s154
    %p158 = scmp.eq.s32.totalorder %s13, 0
    %p159 = por %p157, %p158
    %p160 = scmp.ne.s32.totalorder %s152, %s154
    %p161 = scmp.eq.s32.totalorder %s18, 1
    %p162 = por %p160, %p161
    %p163 = scmp.ne.s32.totalorder %s154, %s155
    %p164 = scmp.eq.s32.totalorder %s18, 0
    %p165 = por %p163, %p164
    %p166 = scmp.ne.s32.totalorder %s154, %s155
    %p167 = scmp.eq.s32.totalorder %s19, 1
    %p168 = por %p166, %p167
    %p170 = scmp.ne.s32.totalorder %s155, %s169
    %p171 = scmp.eq.s32.totalorder %s19, 0
    %p172 = por %p170, %p171
    %s173 = ssub.s32 %s13, %s20
    %p174 = scmp.eq.s32.totalorder %s173, 0
    %s176 = sadd.s32 %s175, 1
    %s177 = scalar_select %p174, %s175, %s176
    %p180 = pneg %p174
    %p181 = scmp.eq.s32.totalorder %s13, 1
    %p182 = por %p180, %p181
    %p183 = scmp.ne.s32.totalorder %s175, %s178
    %p184 = scmp.eq.s32.totalorder %s13, 0
    %p185 = por %p183, %p184
    %p186 = scmp.ne.s32.totalorder %s175, %s178
    %p187 = scmp.eq.s32.totalorder %s18, 1
    %p188 = por %p186, %p187
    %p189 = scmp.ne.s32.totalorder %s178, %s179
    %p190 = scmp.eq.s32.totalorder %s18, 0
    %p191 = por %p189, %p190
    %p192 = scmp.ne.s32.totalorder %s178, %s179
    %p193 = scmp.eq.s32.totalorder %s19, 1
    %p194 = por %p192, %p193
    %p196 = scmp.ne.s32.totalorder %s179, %s195
    %p197 = scmp.eq.s32.totalorder %s19, 0
    %p198 = por %p196, %p197
    %p199 = scmp.le.s32.totalorder 1, %s13
    %p200 = scmp.lt.s32.totalorder %s13, 3
    %p201 = pnand %p199, %p200
    %p202 = pneg %p201
    // Predicated region
    $region9: #{tpu_custom_call.1} parent=5 // pred_check
      _
    $region10: #{tpu_custom_call.1} parent=5 // pred_check_branch
      %204 = sbr.rel (%p201) target = $region12
    $region11: #{tpu_custom_call.1} parent=5 // pred_region
      %s205 = ssub.s32 %s13, 1
      // Predicated region
      $region13: #{tpu_custom_call.1} parent=11 // pred_check
        %p206 = pneg %p60
      $region14: #{tpu_custom_call.1} parent=11 // pred_check_branch
        %208 = sbr.rel (%p206) target = $region16
      $region15: #{tpu_custom_call.1} parent=11 // pred_region
        _
      $region16: #{tpu_custom_call.1} parent=11 // pred_fallthru
        _
      // Predicated region
      $region17: #{tpu_custom_call.1} parent=11 // pred_check
        %p209 = pneg %p81
      $region18: #{tpu_custom_call.1} parent=11 // pred_check_branch
        %211 = sbr.rel (%p209) target = $region20
      $region19: #{tpu_custom_call.1} parent=11 // pred_region
        _
      $region20: #{tpu_custom_call.1} parent=11 // pred_fallthru
        _
      // Predicated region
      $region21: #{tpu_custom_call.1} parent=11 // pred_check
        %p212 = pneg %p102
      $region22: #{tpu_custom_call.1} parent=11 // pred_check_branch
        %214 = sbr.rel (%p212) target = $region24
      $region23: #{tpu_custom_call.1} parent=11 // pred_region
        _
      $region24: #{tpu_custom_call.1} parent=11 // pred_fallthru
        _
      // Predicated region
      $region25: #{tpu_custom_call.1} parent=11 // pred_check
        %p215 = pneg %p123
      $region26: #{tpu_custom_call.1} parent=11 // pred_check_branch
        %217 = sbr.rel (%p215) target = $region28
      $region27: #{tpu_custom_call.1} parent=11 // pred_region
        _
      $region28: #{tpu_custom_call.1} parent=11 // pred_fallthru
        _
      // Predicated region
      $region29: #{tpu_custom_call.1} parent=11 // pred_check
        %p218 = pneg %p144
      $region30: #{tpu_custom_call.1} parent=11 // pred_check_branch
        %220 = sbr.rel (%p218) target = $region32
      $region31: #{tpu_custom_call.1} parent=11 // pred_region
        _
      $region32: #{tpu_custom_call.1} parent=11 // pred_fallthru
        _
      // Predicated region
      $region33: #{tpu_custom_call.1} parent=11 // pred_check
        %p221 = pneg %p165
      $region34: #{tpu_custom_call.1} parent=11 // pred_check_branch
        %223 = sbr.rel (%p221) target = $region36
      $region35: #{tpu_custom_call.1} parent=11 // pred_region
        _
      $region36: #{tpu_custom_call.1} parent=11 // pred_fallthru
        _
    $region12: #{tpu_custom_call.1} parent=5 // pred_fallthru
      _
    %p224 = scmp.lt.s32.totalorder %s13, 2
    // Predicated region
    $region37: #{tpu_custom_call.1} parent=5 // pred_check
      %p225 = pneg %p224
    $region38: #{tpu_custom_call.1} parent=5 // pred_check_branch
      %227 = sbr.rel (%p225) target = $region40
    $region39: #{tpu_custom_call.1} parent=5 // pred_region
      // Predicated region
      $region41: #{tpu_custom_call.1} parent=39 // pred_check
        %p228 = pneg %p33
      $region42: #{tpu_custom_call.1} parent=39 // pred_check_branch
        %230 = sbr.rel (%p228) target = $region44
      $region43: #{tpu_custom_call.1} parent=39 // pred_region
        %s231 = smul.u32 16, %s13
        %p232 = scmp.lt.s32.totalorder %s231, 31
        %s233 = scalar_select %p232, %s231, 31
        %s234 = smul.addr %s233, 8
        %s235 = scalar_lea.vmem %s0, %s234
        %s236 = smul.u32 16, %s13
      $region44: #{tpu_custom_call.1} parent=39 // pred_fallthru
        _
    $region40: #{tpu_custom_call.1} parent=5 // pred_fallthru
      _
    %p237 = scmp.le.s32.totalorder 1, %s13
    %p238 = scmp.lt.s32.totalorder %s13, 3
    %p239 = pnand %p237, %p238
    %p240 = pneg %p239
    // Predicated region
    $region45: #{tpu_custom_call.1} parent=5 // pred_check
      _
    $region46: #{tpu_custom_call.1} parent=5 // pred_check_branch
      %242 = sbr.rel (%p239) target = $region48
    $region47: #{tpu_custom_call.1} parent=5 // pred_region
      %s243 = ssub.s32 %s13, 1
      %s244 = smul.u32 16, %s18
      %p245 = scmp.lt.s32.totalorder %s244, 31
      %s246 = scalar_select %p245, %s244, 31
      %s247 = smul.addr %s246, 8
      %s248 = scalar_lea.vmem %s0, %s247
      %p249 = pneg %p39
      %p250 = pneg %p36
      %p251 = pneg %p60
      %p252 = pneg %p57
      %p253 = pneg %p81
      %p254 = pneg %p78
      %p255 = pneg %p102
      %p256 = pneg %p99
      %p257 = pneg %p123
      %p258 = pneg %p120
      %p259 = pneg %p144
      %p260 = pneg %p141
      %p261 = pneg %p165
      %p262 = pneg %p162
      %p263 = pneg %p191
      %p264 = pneg %p188
      %p265 = scmp.lt.s32.totalorder %s18, 1
      %s266 = scalar_select %p265, %s18, 1
      %s267 = smul.addr %s266, 8
      %s268 = scalar_lea.vmem %s7, %s267
      %s269 = smul.u32 16, %s18
      %p270 = scmp.lt.s32.totalorder %s269, 31
      %s271 = scalar_select %p270, %s269, 31
      %s272 = smul.addr %s271, 8
      %s273 = scalar_lea.vmem %s0, %s272
      %s274 = smul.u32 16, %s18
      %p275 = scmp.lt.s32.totalorder %s18, 1
      %s276 = scalar_select %p275, %s18, 1
      %s277 = smul.addr %s276, 8
      %s278 = scalar_lea.vmem %s7, %s277
      %v279 = vld [vmem:[%s273] sm:$0xff]
      %v280 = vld [vmem:[%s273 + $0x8] sm:$0xff]
      %v281 = vld [vmem:[%s273 + $0x10] sm:$0xff]
      %v282 = vld [vmem:[%s273 + $0x18] sm:$0xff]
      %v283 = vld [vmem:[%s273 + $0x20] sm:$0xff]
      %v284 = vld [vmem:[%s273 + $0x28] sm:$0xff]
      %v285 = vld [vmem:[%s273 + $0x30] sm:$0xff]
      %v286 = vld [vmem:[%s273 + $0x38] sm:$0xff]
      %v287 = vld [vmem:[%s273 + $0x40] sm:$0xff]
      %v288 = vld [vmem:[%s273 + $0x48] sm:$0xff]
      %v289 = vld [vmem:[%s273 + $0x50] sm:$0xff]
      %v290 = vld [vmem:[%s273 + $0x58] sm:$0xff]
      %v291 = vld [vmem:[%s273 + $0x60] sm:$0xff]
      %v292 = vld [vmem:[%s273 + $0x68] sm:$0xff]
      %v293 = vld [vmem:[%s273 + $0x70] sm:$0xff]
      %v294 = vld [vmem:[%s273 + $0x78] sm:$0xff]
      %v295 = vld [vmem:[%s1] sm:$0xff]
      %v296 = vld [vmem:[%s1 + $0x8] sm:$0xff]
      %v297 = vld [vmem:[%s1 + $0x10] sm:$0xf]
      %v298 = vld [vmem:[%s2] sm:$0x1]
      %v300 = vlaneseq
      %v301 = vshrl.u32 %v300, 7
      %v302 = vsub.s32 0, %v301
      %v303 = vrot.slane %v298, %v302
      %vm305 = vcmask 162816
      %v307 = vsel %vm305, %v279, 0
      %v310 = vsel %vm305, %v280, 0
      %v313 = vsel %vm305, %v281, 0
      %v316 = vsel %vm305, %v282, 0
      %v319 = vsel %vm305, %v283, 0
      %v322 = vsel %vm305, %v284, 0
      %v325 = vsel %vm305, %v285, 0
      %v328 = vsel %vm305, %v286, 0
      %v331 = vsel %vm305, %v287, 0
      %v334 = vsel %vm305, %v288, 0
      %v337 = vsel %vm305, %v289, 0
      %v340 = vsel %vm305, %v290, 0
      %v343 = vsel %vm305, %v291, 0
      %v346 = vsel %vm305, %v292, 0
      %v349 = vsel %vm305, %v293, 0
      %v352 = vsel %vm305, %v294, 0
      %vm354 = vcmask 1043456
      %v356 = vsel %vm354, %v297, 0
      %358 = vmatprep.subr.mxu0 0.0
      %359 = vmatpush1.msra.mxu0 0.0
      %360 = vmatprep.subr.mxu0 0.0
      %361 = vmatpush1.msra.mxu0 0.0
      %362 = vmatprep.subr.mxu0 0.0
      %363 = vmatpush1.msra.mxu0 0.0
      %364 = vmatprep.subr.mxu0 0.0
      %365 = vmatpush1.msra.mxu0 0.0
      %366 = vmatprep.subr.mxu0 0.0
      %367 = vmatpush1.msra.mxu0 0.0
      %368 = vmatprep.subr.mxu0 0.0
      %369 = vmatpush1.msra.mxu0 0.0
      %370 = vmatprep.subr.mxu0 0.0
      %371 = vmatpush1.msra.mxu0 0.0
      %372 = vmatprep.subr.mxu0 0.0
      %373 = vmatpush1.msra.mxu0 0.0
      %374 = vmatprep.subr.mxu0 0.0
      %375 = vmatpush1.msra.mxu0 0.0
      %376 = vmatprep.subr.mxu0 0.0
      %377 = vmatpush1.msra.mxu0 0.0
      %378 = vmatprep.subr.mxu0 0.0
      %379 = vmatpush1.msra.mxu0 0.0
      %380 = vmatprep.subr.mxu0 0.0
      %381 = vmatpush1.msra.mxu0 0.0
      %382 = vmatprep.subr.mxu0 0.0
      %383 = vmatpush1.msra.mxu0 0.0
      %384 = vmatprep.subr.mxu0 0.0
      %385 = vmatpush1.msra.mxu0 %v356
      %386 = vmatprep.subr.mxu0 0.0
      %387 = vmatpush1.msra.mxu0 %v296
      %388 = vmatprep.subr.mxu0 0.0
      %389 = vmatpush1.msra.mxu0 %v295
      %390 = vmatprep.subr.mxu0 0.0
      %391 = vmatpush2.msra.mxu0 0.0
      %392 = vmatprep.subr.mxu0 0.0
      %393 = vmatpush2.msra.mxu0 0.0
      %394 = vmatprep.subr.mxu0 0.0
      %395 = vmatpush2.msra.mxu0 0.0
      %396 = vmatprep.subr.mxu0 0.0
      %397 = vmatpush2.msra.mxu0 0.0
      %398 = vmatprep.subr.mxu0 0.0
      %399 = vmatpush2.msra.mxu0 0.0
      %400 = vmatprep.subr.mxu0 0.0
      %401 = vmatpush2.msra.mxu0 0.0
      %402 = vmatprep.subr.mxu0 0.0
      %403 = vmatpush2.msra.mxu0 0.0
      %404 = vmatprep.subr.mxu0 0.0
      %405 = vmatpush2.msra.mxu0 0.0
      %406 = vmatprep.subr.mxu0 0.0
      %407 = vmatpush2.msra.mxu0 0.0
      %408 = vmatprep.subr.mxu0 0.0
      %409 = vmatpush2.msra.mxu0 0.0
      %410 = vmatprep.subr.mxu0 0.0
      %411 = vmatpush2.msra.mxu0 0.0
      %412 = vmatprep.subr.mxu0 0.0
      %413 = vmatpush2.msra.mxu0 0.0
      %414 = vmatprep.subr.mxu0 0.0
      %415 = vmatpush2.msra.mxu0 0.0
      %416 = vmatprep.subr.mxu0 0.0
      %417 = vmatpush2.msra.mxu0 0.0
      %418 = vmatprep.subr.mxu0 0.0
      %419 = vmatpush2.msra.mxu0 0.0
      %420 = vmatprep.subr.mxu0 0.0
      %421 = vmatpush2.msra.mxu0 0.0
      %422 = vmatprep.mubr.f32.mxu0 0.0
      %423 = vmatmul.mubr.f32.gmra.mxu0 %v307
      %v424 = vpop.f32.mrf.mxu0
      %v425 = vadd.f32 %v303, %v424
      %v426 = vpop.f32.mrf.mxu0
      %427 = vmatprep.mubr.f32.mxu0 0.0
      %428 = vmatmul.mubr.f32.gmra.mxu0 %v310
      %v429 = vpop.f32.mrf.mxu0
      %v430 = vadd.f32 %v303, %v429
      %v431 = vpop.f32.mrf.mxu0
      %432 = vmatprep.mubr.f32.mxu0 0.0
      %433 = vmatmul.mubr.f32.gmra.mxu0 %v313
      %v434 = vpop.f32.mrf.mxu0
      %v435 = vadd.f32 %v303, %v434
      %v436 = vpop.f32.mrf.mxu0
      %437 = vmatprep.mubr.f32.mxu0 0.0
      %438 = vmatmul.mubr.f32.gmra.mxu0 %v316
      %v439 = vpop.f32.mrf.mxu0
      %v440 = vadd.f32 %v303, %v439
      %v441 = vpop.f32.mrf.mxu0
      %442 = vmatprep.mubr.f32.mxu0 0.0
      %443 = vmatmul.mubr.f32.gmra.mxu0 %v319
      %v444 = vpop.f32.mrf.mxu0
      %v445 = vadd.f32 %v303, %v444
      %v446 = vpop.f32.mrf.mxu0
      %447 = vmatprep.mubr.f32.mxu0 0.0
      %448 = vmatmul.mubr.f32.gmra.mxu0 %v322
      %v449 = vpop.f32.mrf.mxu0
      %v450 = vadd.f32 %v303, %v449
      %v451 = vpop.f32.mrf.mxu0
      %452 = vmatprep.mubr.f32.mxu0 0.0
      %453 = vmatmul.mubr.f32.gmra.mxu0 %v325
      %v454 = vpop.f32.mrf.mxu0
      %v455 = vadd.f32 %v303, %v454
      %v456 = vpop.f32.mrf.mxu0
      %457 = vmatprep.mubr.f32.mxu0 0.0
      %458 = vmatmul.mubr.f32.gmra.mxu0 %v328
      %v459 = vpop.f32.mrf.mxu0
      %v460 = vadd.f32 %v303, %v459
      %v461 = vpop.f32.mrf.mxu0
      %462 = vmatprep.mubr.f32.mxu0 0.0
      %463 = vmatmul.mubr.f32.gmra.mxu0 %v331
      %v464 = vpop.f32.mrf.mxu0
      %v465 = vadd.f32 %v303, %v464
      %v466 = vpop.f32.mrf.mxu0
      %467 = vmatprep.mubr.f32.mxu0 0.0
      %468 = vmatmul.mubr.f32.gmra.mxu0 %v334
      %v469 = vpop.f32.mrf.mxu0
      %v470 = vadd.f32 %v303, %v469
      %v471 = vpop.f32.mrf.mxu0
      %472 = vmatprep.mubr.f32.mxu0 0.0
      %473 = vmatmul.mubr.f32.gmra.mxu0 %v337
      %v474 = vpop.f32.mrf.mxu0
      %v475 = vadd.f32 %v303, %v474
      %v476 = vpop.f32.mrf.mxu0
      %477 = vmatprep.mubr.f32.mxu0 0.0
      %478 = vmatmul.mubr.f32.gmra.mxu0 %v340
      %v479 = vpop.f32.mrf.mxu0
      %v480 = vadd.f32 %v303, %v479
      %v481 = vpop.f32.mrf.mxu0
      %482 = vmatprep.mubr.f32.mxu0 0.0
      %483 = vmatmul.mubr.f32.gmra.mxu0 %v343
      %v484 = vpop.f32.mrf.mxu0
      %v485 = vadd.f32 %v303, %v484
      %v486 = vpop.f32.mrf.mxu0
      %487 = vmatprep.mubr.f32.mxu0 0.0
      %488 = vmatmul.mubr.f32.gmra.mxu0 %v346
      %v489 = vpop.f32.mrf.mxu0
      %v490 = vadd.f32 %v303, %v489
      %v491 = vpop.f32.mrf.mxu0
      %492 = vmatprep.mubr.f32.mxu0 0.0
      %493 = vmatmul.mubr.f32.gmra.mxu0 %v349
      %v494 = vpop.f32.mrf.mxu0
      %v495 = vadd.f32 %v303, %v494
      %v496 = vpop.f32.mrf.mxu0
      %497 = vmatprep.mubr.f32.mxu0 0.0
      %498 = vmatmul.mubr.f32.gmra.mxu0 %v352
      %v499 = vpop.f32.mrf.mxu0
      %v500 = vadd.f32 %v303, %v499
      %v501 = vpop.f32.mrf.mxu0
      %502 = vdwg.mxu0
      %v503 = vmax.f32 %v425, 0.0
      %v504 = vmax.f32 %v430, 0.0
      %v505 = vmax.f32 %v435, 0.0
      %v506 = vmax.f32 %v440, 0.0
      %v507 = vmax.f32 %v445, 0.0
      %v508 = vmax.f32 %v450, 0.0
      %v509 = vmax.f32 %v455, 0.0
      %v510 = vmax.f32 %v460, 0.0
      %v511 = vmax.f32 %v465, 0.0
      %v512 = vmax.f32 %v470, 0.0
      %v513 = vmax.f32 %v475, 0.0
      %v514 = vmax.f32 %v480, 0.0
      %v515 = vmax.f32 %v485, 0.0
      %v516 = vmax.f32 %v490, 0.0
      %v517 = vmax.f32 %v495, 0.0
      %v518 = vmax.f32 %v500, 0.0
      %v519 = vrot.slane %v503, 1
      %v520 = vrot.slane %v504, 1
      %v521 = vrot.slane %v505, 1
      %v522 = vrot.slane %v506, 1
      %v523 = vrot.slane %v507, 1
      %v524 = vrot.slane %v508, 1
      %v525 = vrot.slane %v509, 1
      %v526 = vrot.slane %v510, 1
      %v527 = vrot.slane %v511, 1
      %v528 = vrot.slane %v512, 1
      %v529 = vrot.slane %v513, 1
      %v530 = vrot.slane %v514, 1
      %v531 = vrot.slane %v515, 1
      %v532 = vrot.slane %v516, 1
      %v533 = vrot.slane %v517, 1
      %v534 = vrot.slane %v518, 1
      %v535 = vlaneseq
      %v536 = vshrl.u32 %v535, 7
      %vm537 = vcmp.lt.s32.totalorder %v536, 7
      %v538 = vsel %vm537, %v533, %v534
      %v539 = vsel %vm537, %v532, %v533
      %v540 = vsel %vm537, %v531, %v532
      %v541 = vsel %vm537, %v530, %v531
      %v542 = vsel %vm537, %v529, %v530
      %v543 = vsel %vm537, %v528, %v529
      %v544 = vsel %vm537, %v527, %v528
      %v545 = vsel %vm537, %v526, %v527
      %v546 = vsel %vm537, %v525, %v526
      %v547 = vsel %vm537, %v524, %v525
      %v548 = vsel %vm537, %v523, %v524
      %v549 = vsel %vm537, %v522, %v523
      %v550 = vsel %vm537, %v521, %v522
      %v551 = vsel %vm537, %v520, %v521
      %v552 = vsel %vm537, %v519, %v520
      %v553 = vsel %vm537, %v534, %v519
      %570 = vrot.lane.b32.xlu0 %v552, 32
      %v571 = vpop.permute.xlu0 %570
      %572 = vrot.lane.b32.xlu0 %v551, 32
      %v573 = vpop.permute.xlu0 %572
      %574 = vrot.lane.b32.xlu0 %v550, 32
      %v575 = vpop.permute.xlu0 %574
      %576 = vrot.lane.b32.xlu0 %v549, 32
      %v577 = vpop.permute.xlu0 %576
      %578 = vrot.lane.b32.xlu0 %v548, 32
      %v579 = vpop.permute.xlu0 %578
      %580 = vrot.lane.b32.xlu0 %v547, 32
      %v581 = vpop.permute.xlu0 %580
      %582 = vrot.lane.b32.xlu0 %v546, 32
      %v583 = vpop.permute.xlu0 %582
      %584 = vrot.lane.b32.xlu0 %v545, 32
      %v585 = vpop.permute.xlu0 %584
      %586 = vrot.lane.b32.xlu0 %v544, 32
      %v587 = vpop.permute.xlu0 %586
      %588 = vrot.lane.b32.xlu0 %v543, 32
      %v589 = vpop.permute.xlu0 %588
      %590 = vrot.lane.b32.xlu0 %v542, 32
      %v591 = vpop.permute.xlu0 %590
      %592 = vrot.lane.b32.xlu0 %v541, 32
      %v593 = vpop.permute.xlu0 %592
      %594 = vrot.lane.b32.xlu0 %v540, 32
      %v595 = vpop.permute.xlu0 %594
      %596 = vrot.lane.b32.xlu0 %v539, 32
      %v597 = vpop.permute.xlu0 %596
      %598 = vrot.lane.b32.xlu0 %v538, 32
      %v599 = vpop.permute.xlu0 %598
      %600 = vrot.lane.b32.xlu0 %v553, 32
      %v601 = vpop.permute.xlu0 %600
      %vm618 = vcmask 261120
      %v619 = vsel %vm618, %v503, %v571
      %v620 = vsel %vm618, %v504, %v573
      %v621 = vsel %vm618, %v505, %v575
      %v622 = vsel %vm618, %v506, %v577
      %v623 = vsel %vm618, %v507, %v579
      %v624 = vsel %vm618, %v508, %v581
      %v625 = vsel %vm618, %v509, %v583
      %v626 = vsel %vm618, %v510, %v585
      %v627 = vsel %vm618, %v511, %v587
      %v628 = vsel %vm618, %v512, %v589
      %v629 = vsel %vm618, %v513, %v591
      %v630 = vsel %vm618, %v514, %v593
      %v631 = vsel %vm618, %v515, %v595
      %v632 = vsel %vm618, %v516, %v597
      %v633 = vsel %vm618, %v517, %v599
      %v634 = vsel %vm618, %v518, %v601
      %v635 = vld [vmem:[%s3] sm:$0xff]
      %v636 = vld [vmem:[%s3 + $0x8] sm:$0xff]
      %v637 = vld [vmem:[%s3 + $0x10] sm:$0xff]
      %v638 = vld [vmem:[%s3 + $0x18] sm:$0xff]
      %v639 = vld [vmem:[%s3 + $0x20] sm:$0xff]
      %v640 = vld [vmem:[%s3 + $0x28] sm:$0xff]
      %v641 = vld [vmem:[%s3 + $0x30] sm:$0xff]
      %v642 = vld [vmem:[%s3 + $0x38] sm:$0xff]
      %v643 = vld [vmem:[%s4] sm:$0x1]
      %v645 = vlaneseq
      %v646 = vshrl.u32 %v645, 7
      %v647 = vsub.s32 0, %v646
      %v648 = vrot.slane %v643, %v647
      %vm650 = vcmask 523264
      %v652 = vsel %vm650, %v619, 0
      %v655 = vsel %vm650, %v620, 0
      %v658 = vsel %vm650, %v621, 0
      %v661 = vsel %vm650, %v622, 0
      %v664 = vsel %vm650, %v623, 0
      %v667 = vsel %vm650, %v624, 0
      %v670 = vsel %vm650, %v625, 0
      %v673 = vsel %vm650, %v626, 0
      %v676 = vsel %vm650, %v627, 0
      %v679 = vsel %vm650, %v628, 0
      %v682 = vsel %vm650, %v629, 0
      %v685 = vsel %vm650, %v630, 0
      %v688 = vsel %vm650, %v631, 0
      %v691 = vsel %vm650, %v632, 0
      %v694 = vsel %vm650, %v633, 0
      %v697 = vsel %vm650, %v634, 0
      %699 = vmatprep.subr.mxu0 0.0
      %700 = vmatpush1.msra.mxu0 0.0
      %701 = vmatprep.subr.mxu0 0.0
      %702 = vmatpush1.msra.mxu0 0.0
      %703 = vmatprep.subr.mxu0 0.0
      %704 = vmatpush1.msra.mxu0 0.0
      %705 = vmatprep.subr.mxu0 0.0
      %706 = vmatpush1.msra.mxu0 0.0
      %707 = vmatprep.subr.mxu0 0.0
      %708 = vmatpush1.msra.mxu0 0.0
      %709 = vmatprep.subr.mxu0 0.0
      %710 = vmatpush1.msra.mxu0 0.0
      %711 = vmatprep.subr.mxu0 0.0
      %712 = vmatpush1.msra.mxu0 0.0
      %713 = vmatprep.subr.mxu0 0.0
      %714 = vmatpush1.msra.mxu0 0.0
      %715 = vmatprep.subr.mxu0 0.0
      %716 = vmatpush1.msra.mxu0 %v642
      %717 = vmatprep.subr.mxu0 0.0
      %718 = vmatpush1.msra.mxu0 %v641
      %719 = vmatprep.subr.mxu0 0.0
      %720 = vmatpush1.msra.mxu0 %v640
      %721 = vmatprep.subr.mxu0 0.0
      %722 = vmatpush1.msra.mxu0 %v639
      %723 = vmatprep.subr.mxu0 0.0
      %724 = vmatpush1.msra.mxu0 %v638
      %725 = vmatprep.subr.mxu0 0.0
      %726 = vmatpush1.msra.mxu0 %v637
      %727 = vmatprep.subr.mxu0 0.0
      %728 = vmatpush1.msra.mxu0 %v636
      %729 = vmatprep.subr.mxu0 0.0
      %730 = vmatpush1.msra.mxu0 %v635
      %731 = vmatprep.subr.mxu0 0.0
      %732 = vmatpush2.msra.mxu0 0.0
      %733 = vmatprep.subr.mxu0 0.0
      %734 = vmatpush2.msra.mxu0 0.0
      %735 = vmatprep.subr.mxu0 0.0
      %736 = vmatpush2.msra.mxu0 0.0
      %737 = vmatprep.subr.mxu0 0.0
      %738 = vmatpush2.msra.mxu0 0.0
      %739 = vmatprep.subr.mxu0 0.0
      %740 = vmatpush2.msra.mxu0 0.0
      %741 = vmatprep.subr.mxu0 0.0
      %742 = vmatpush2.msra.mxu0 0.0
      %743 = vmatprep.subr.mxu0 0.0
      %744 = vmatpush2.msra.mxu0 0.0
      %745 = vmatprep.subr.mxu0 0.0
      %746 = vmatpush2.msra.mxu0 0.0
      %747 = vmatprep.subr.mxu0 0.0
      %748 = vmatpush2.msra.mxu0 0.0
      %749 = vmatprep.subr.mxu0 0.0
      %750 = vmatpush2.msra.mxu0 0.0
      %751 = vmatprep.subr.mxu0 0.0
      %752 = vmatpush2.msra.mxu0 0.0
      %753 = vmatprep.subr.mxu0 0.0
      %754 = vmatpush2.msra.mxu0 0.0
      %755 = vmatprep.subr.mxu0 0.0
      %756 = vmatpush2.msra.mxu0 0.0
      %757 = vmatprep.subr.mxu0 0.0
      %758 = vmatpush2.msra.mxu0 0.0
      %759 = vmatprep.subr.mxu0 0.0
      %760 = vmatpush2.msra.mxu0 0.0
      %761 = vmatprep.subr.mxu0 0.0
      %762 = vmatpush2.msra.mxu0 0.0
      %763 = vmatprep.mubr.f32.mxu0 0.0
      %764 = vmatmul.mubr.f32.gmra.mxu0 %v652
      %v765 = vpop.f32.mrf.mxu0
      %v766 = vadd.f32 %v648, %v765
      %v767 = vpop.f32.mrf.mxu0
      %768 = vmatprep.mubr.f32.mxu0 0.0
      %769 = vmatmul.mubr.f32.gmra.mxu0 %v655
      %v770 = vpop.f32.mrf.mxu0
      %v771 = vadd.f32 %v648, %v770
      %v772 = vpop.f32.mrf.mxu0
      %773 = vmatprep.mubr.f32.mxu0 0.0
      %774 = vmatmul.mubr.f32.gmra.mxu0 %v658
      %v775 = vpop.f32.mrf.mxu0
      %v776 = vadd.f32 %v648, %v775
      %v777 = vpop.f32.mrf.mxu0
      %778 = vmatprep.mubr.f32.mxu0 0.0
      %779 = vmatmul.mubr.f32.gmra.mxu0 %v661
      %v780 = vpop.f32.mrf.mxu0
      %v781 = vadd.f32 %v648, %v780
      %v782 = vpop.f32.mrf.mxu0
      %783 = vmatprep.mubr.f32.mxu0 0.0
      %784 = vmatmul.mubr.f32.gmra.mxu0 %v664
      %v785 = vpop.f32.mrf.mxu0
      %v786 = vadd.f32 %v648, %v785
      %v787 = vpop.f32.mrf.mxu0
      %788 = vmatprep.mubr.f32.mxu0 0.0
      %789 = vmatmul.mubr.f32.gmra.mxu0 %v667
      %v790 = vpop.f32.mrf.mxu0
      %v791 = vadd.f32 %v648, %v790
      %v792 = vpop.f32.mrf.mxu0
      %793 = vmatprep.mubr.f32.mxu0 0.0
      %794 = vmatmul.mubr.f32.gmra.mxu0 %v670
      %v795 = vpop.f32.mrf.mxu0
      %v796 = vadd.f32 %v648, %v795
      %v797 = vpop.f32.mrf.mxu0
      %798 = vmatprep.mubr.f32.mxu0 0.0
      %799 = vmatmul.mubr.f32.gmra.mxu0 %v673
      %v800 = vpop.f32.mrf.mxu0
      %v801 = vadd.f32 %v648, %v800
      %v802 = vpop.f32.mrf.mxu0
      %803 = vmatprep.mubr.f32.mxu0 0.0
      %804 = vmatmul.mubr.f32.gmra.mxu0 %v676
      %v805 = vpop.f32.mrf.mxu0
      %v806 = vadd.f32 %v648, %v805
      %v807 = vpop.f32.mrf.mxu0
      %808 = vmatprep.mubr.f32.mxu0 0.0
      %809 = vmatmul.mubr.f32.gmra.mxu0 %v679
      %v810 = vpop.f32.mrf.mxu0
      %v811 = vadd.f32 %v648, %v810
      %v812 = vpop.f32.mrf.mxu0
      %813 = vmatprep.mubr.f32.mxu0 0.0
      %814 = vmatmul.mubr.f32.gmra.mxu0 %v682
      %v815 = vpop.f32.mrf.mxu0
      %v816 = vadd.f32 %v648, %v815
      %v817 = vpop.f32.mrf.mxu0
      %818 = vmatprep.mubr.f32.mxu0 0.0
      %819 = vmatmul.mubr.f32.gmra.mxu0 %v685
      %v820 = vpop.f32.mrf.mxu0
      %v821 = vadd.f32 %v648, %v820
      %v822 = vpop.f32.mrf.mxu0
      %823 = vmatprep.mubr.f32.mxu0 0.0
      %824 = vmatmul.mubr.f32.gmra.mxu0 %v688
      %v825 = vpop.f32.mrf.mxu0
      %v826 = vadd.f32 %v648, %v825
      %v827 = vpop.f32.mrf.mxu0
      %828 = vmatprep.mubr.f32.mxu0 0.0
      %829 = vmatmul.mubr.f32.gmra.mxu0 %v691
      %v830 = vpop.f32.mrf.mxu0
      %v831 = vadd.f32 %v648, %v830
      %v832 = vpop.f32.mrf.mxu0
      %833 = vmatprep.mubr.f32.mxu0 0.0
      %834 = vmatmul.mubr.f32.gmra.mxu0 %v694
      %v835 = vpop.f32.mrf.mxu0
      %v836 = vadd.f32 %v648, %v835
      %v837 = vpop.f32.mrf.mxu0
      %838 = vmatprep.mubr.f32.mxu0 0.0
      %839 = vmatmul.mubr.f32.gmra.mxu0 %v697
      %v840 = vpop.f32.mrf.mxu0
      %v841 = vadd.f32 %v648, %v840
      %v842 = vpop.f32.mrf.mxu0
      %843 = vdwg.mxu0
      %v844 = vmax.f32 %v766, 0.0
      %v845 = vmax.f32 %v771, 0.0
      %v846 = vmax.f32 %v776, 0.0
      %v847 = vmax.f32 %v781, 0.0
      %v848 = vmax.f32 %v786, 0.0
      %v849 = vmax.f32 %v791, 0.0
      %v850 = vmax.f32 %v796, 0.0
      %v851 = vmax.f32 %v801, 0.0
      %v852 = vmax.f32 %v806, 0.0
      %v853 = vmax.f32 %v811, 0.0
      %v854 = vmax.f32 %v816, 0.0
      %v855 = vmax.f32 %v821, 0.0
      %v856 = vmax.f32 %v826, 0.0
      %v857 = vmax.f32 %v831, 0.0
      %v858 = vmax.f32 %v836, 0.0
      %v859 = vmax.f32 %v841, 0.0
      %v876 = vcombine.high %v844, %v844
      %v878 = vunpack.c.l.s4 1966171168
      %v879 = vunpack.c.0.s8 %v878
      %v880 = vlaneseq
      %v881 = vshrl.u32 %v880, 7
      %v882 = vsub.s32 %v879, %v881
      %v883 = vrot.slane %v844, %v882
      %v885 = vunpack.c.l.s4 1966171168
      %v886 = vunpack.c.0.s8 %v885
      %v887 = vlaneseq
      %v888 = vshrl.u32 %v887, 7
      %v889 = vsub.s32 %v886, %v888
      %v890 = vrot.slane %v876, %v889
      %v891 = vcombine.high %v883, %v883
      %v892 = vcombine.high %v890, %v890
      %v894 = vunpack.c.l.s4 1966171168
      %v895 = vunpack.c.0.s8 %v894
      %v896 = vlaneseq
      %v897 = vshrl.u32 %v896, 7
      %v898 = vsub.s32 %v895, %v897
      %v899 = vrot.slane %v883, %v898
      %v901 = vunpack.c.l.s4 1966171168
      %v902 = vunpack.c.0.s8 %v901
      %v903 = vlaneseq
      %v904 = vshrl.u32 %v903, 7
      %v905 = vsub.s32 %v902, %v904
      %v906 = vrot.slane %v890, %v905
      %v908 = vunpack.c.l.s4 1966171168
      %v909 = vunpack.c.0.s8 %v908
      %v910 = vlaneseq
      %v911 = vshrl.u32 %v910, 7
      %v912 = vsub.s32 %v909, %v911
      %v913 = vrot.slane %v891, %v912
      %v915 = vunpack.c.l.s4 1966171168
      %v916 = vunpack.c.0.s8 %v915
      %v917 = vlaneseq
      %v918 = vshrl.u32 %v917, 7
      %v919 = vsub.s32 %v916, %v918
      %v920 = vrot.slane %v892, %v919
      %v921 = vcombine.high %v899, %v899
      %v922 = vcombine.high %v906, %v906
      %v923 = vcombine.high %v913, %v913
      %v924 = vcombine.high %v920, %v920
      %v925 = vcombine.high %v845, %v845
      %v927 = vunpack.c.l.s4 1966171168
      %v928 = vunpack.c.0.s8 %v927
      %v929 = vlaneseq
      %v930 = vshrl.u32 %v929, 7
      %v931 = vsub.s32 %v928, %v930
      %v932 = vrot.slane %v845, %v931
      %v934 = vunpack.c.l.s4 1966171168
      %v935 = vunpack.c.0.s8 %v934
      %v936 = vlaneseq
      %v937 = vshrl.u32 %v936, 7
      %v938 = vsub.s32 %v935, %v937
      %v939 = vrot.slane %v925, %v938
      %v940 = vcombine.high %v932, %v932
      %v941 = vcombine.high %v939, %v939
      %v943 = vunpack.c.l.s4 1966171168
      %v944 = vunpack.c.0.s8 %v943
      %v945 = vlaneseq
      %v946 = vshrl.u32 %v945, 7
      %v947 = vsub.s32 %v944, %v946
      %v948 = vrot.slane %v932, %v947
      %v950 = vunpack.c.l.s4 1966171168
      %v951 = vunpack.c.0.s8 %v950
      %v952 = vlaneseq
      %v953 = vshrl.u32 %v952, 7
      %v954 = vsub.s32 %v951, %v953
      %v955 = vrot.slane %v939, %v954
      %v957 = vunpack.c.l.s4 1966171168
      %v958 = vunpack.c.0.s8 %v957
      %v959 = vlaneseq
      %v960 = vshrl.u32 %v959, 7
      %v961 = vsub.s32 %v958, %v960
      %v962 = vrot.slane %v940, %v961
      %v964 = vunpack.c.l.s4 1966171168
      %v965 = vunpack.c.0.s8 %v964
      %v966 = vlaneseq
      %v967 = vshrl.u32 %v966, 7
      %v968 = vsub.s32 %v965, %v967
      %v969 = vrot.slane %v941, %v968
      %v970 = vcombine.high %v948, %v948
      %v971 = vcombine.high %v955, %v955
      %v972 = vcombine.high %v962, %v962
      %v973 = vcombine.high %v846, %v846
      %v975 = vunpack.c.l.s4 1966171168
      %v976 = vunpack.c.0.s8 %v975
      %v977 = vlaneseq
      %v978 = vshrl.u32 %v977, 7
      %v979 = vsub.s32 %v976, %v978
      %v980 = vrot.slane %v846, %v979
      %v982 = vunpack.c.l.s4 1966171168
      %v983 = vunpack.c.0.s8 %v982
      %v984 = vlaneseq
      %v985 = vshrl.u32 %v984, 7
      %v986 = vsub.s32 %v983, %v985
      %v987 = vrot.slane %v973, %v986
      %v988 = vcombine.high %v980, %v980
      %v989 = vcombine.high %v987, %v987
      %v991 = vunpack.c.l.s4 1966171168
      %v992 = vunpack.c.0.s8 %v991
      %v993 = vlaneseq
      %v994 = vshrl.u32 %v993, 7
      %v995 = vsub.s32 %v992, %v994
      %v996 = vrot.slane %v980, %v995
      %v998 = vunpack.c.l.s4 1966171168
      %v999 = vunpack.c.0.s8 %v998
      %v1000 = vlaneseq
      %v1001 = vshrl.u32 %v1000, 7
      %v1002 = vsub.s32 %v999, %v1001
      %v1003 = vrot.slane %v987, %v1002
      %v1005 = vunpack.c.l.s4 1966171168
      %v1006 = vunpack.c.0.s8 %v1005
      %v1007 = vlaneseq
      %v1008 = vshrl.u32 %v1007, 7
      %v1009 = vsub.s32 %v1006, %v1008
      %v1010 = vrot.slane %v988, %v1009
      %v1012 = vunpack.c.l.s4 1966171168
      %v1013 = vunpack.c.0.s8 %v1012
      %v1014 = vlaneseq
      %v1015 = vshrl.u32 %v1014, 7
      %v1016 = vsub.s32 %v1013, %v1015
      %v1017 = vrot.slane %v989, %v1016
      %v1018 = vcombine.high %v996, %v996
      %v1019 = vcombine.high %v1003, %v1003
      %v1020 = vcombine.high %v1010, %v1010
      %v1021 = vcombine.high %v1017, %v1017
      %v1022 = vcombine.high %v847, %v847
      %v1024 = vunpack.c.l.s4 1966171168
      %v1025 = vunpack.c.0.s8 %v1024
      %v1026 = vlaneseq
      %v1027 = vshrl.u32 %v1026, 7
      %v1028 = vsub.s32 %v1025, %v1027
      %v1029 = vrot.slane %v847, %v1028
      %v1031 = vunpack.c.l.s4 1966171168
      %v1032 = vunpack.c.0.s8 %v1031
      %v1033 = vlaneseq
      %v1034 = vshrl.u32 %v1033, 7
      %v1035 = vsub.s32 %v1032, %v1034
      %v1036 = vrot.slane %v1022, %v1035
      %v1037 = vcombine.high %v1029, %v1029
      %v1038 = vcombine.high %v1036, %v1036
      %v1040 = vunpack.c.l.s4 1966171168
      %v1041 = vunpack.c.0.s8 %v1040
      %v1042 = vlaneseq
      %v1043 = vshrl.u32 %v1042, 7
      %v1044 = vsub.s32 %v1041, %v1043
      %v1045 = vrot.slane %v1029, %v1044
      %v1047 = vunpack.c.l.s4 1966171168
      %v1048 = vunpack.c.0.s8 %v1047
      %v1049 = vlaneseq
      %v1050 = vshrl.u32 %v1049, 7
      %v1051 = vsub.s32 %v1048, %v1050
      %v1052 = vrot.slane %v1036, %v1051
      %v1054 = vunpack.c.l.s4 1966171168
      %v1055 = vunpack.c.0.s8 %v1054
      %v1056 = vlaneseq
      %v1057 = vshrl.u32 %v1056, 7
      %v1058 = vsub.s32 %v1055, %v1057
      %v1059 = vrot.slane %v1037, %v1058
      %v1061 = vunpack.c.l.s4 1966171168
      %v1062 = vunpack.c.0.s8 %v1061
      %v1063 = vlaneseq
      %v1064 = vshrl.u32 %v1063, 7
      %v1065 = vsub.s32 %v1062, %v1064
      %v1066 = vrot.slane %v1038, %v1065
      %v1067 = vcombine.high %v1045, %v1045
      %v1068 = vcombine.high %v1052, %v1052
      %v1069 = vcombine.high %v1059, %v1059
      %v1070 = vcombine.high %v848, %v848
      %v1072 = vunpack.c.l.s4 1966171168
      %v1073 = vunpack.c.0.s8 %v1072
      %v1074 = vlaneseq
      %v1075 = vshrl.u32 %v1074, 7
      %v1076 = vsub.s32 %v1073, %v1075
      %v1077 = vrot.slane %v848, %v1076
      %v1079 = vunpack.c.l.s4 1966171168
      %v1080 = vunpack.c.0.s8 %v1079
      %v1081 = vlaneseq
      %v1082 = vshrl.u32 %v1081, 7
      %v1083 = vsub.s32 %v1080, %v1082
      %v1084 = vrot.slane %v1070, %v1083
      %v1085 = vcombine.high %v1077, %v1077
      %v1086 = vcombine.high %v1084, %v1084
      %v1088 = vunpack.c.l.s4 1966171168
      %v1089 = vunpack.c.0.s8 %v1088
      %v1090 = vlaneseq
      %v1091 = vshrl.u32 %v1090, 7
      %v1092 = vsub.s32 %v1089, %v1091
      %v1093 = vrot.slane %v1077, %v1092
      %v1095 = vunpack.c.l.s4 1966171168
      %v1096 = vunpack.c.0.s8 %v1095
      %v1097 = vlaneseq
      %v1098 = vshrl.u32 %v1097, 7
      %v1099 = vsub.s32 %v1096, %v1098
      %v1100 = vrot.slane %v1084, %v1099
      %v1102 = vunpack.c.l.s4 1966171168
      %v1103 = vunpack.c.0.s8 %v1102
      %v1104 = vlaneseq
      %v1105 = vshrl.u32 %v1104, 7
      %v1106 = vsub.s32 %v1103, %v1105
      %v1107 = vrot.slane %v1085, %v1106
      %v1109 = vunpack.c.l.s4 1966171168
      %v1110 = vunpack.c.0.s8 %v1109
      %v1111 = vlaneseq
      %v1112 = vshrl.u32 %v1111, 7
      %v1113 = vsub.s32 %v1110, %v1112
      %v1114 = vrot.slane %v1086, %v1113
      %v1115 = vcombine.high %v1093, %v1093
      %v1116 = vcombine.high %v1100, %v1100
      %v1117 = vcombine.high %v1107, %v1107
      %v1118 = vcombine.high %v1114, %v1114
      %v1119 = vcombine.high %v849, %v849
      %v1121 = vunpack.c.l.s4 1966171168
      %v1122 = vunpack.c.0.s8 %v1121
      %v1123 = vlaneseq
      %v1124 = vshrl.u32 %v1123, 7
      %v1125 = vsub.s32 %v1122, %v1124
      %v1126 = vrot.slane %v849, %v1125
      %v1128 = vunpack.c.l.s4 1966171168
      %v1129 = vunpack.c.0.s8 %v1128
      %v1130 = vlaneseq
      %v1131 = vshrl.u32 %v1130, 7
      %v1132 = vsub.s32 %v1129, %v1131
      %v1133 = vrot.slane %v1119, %v1132
      %v1134 = vcombine.high %v1126, %v1126
      %v1135 = vcombine.high %v1133, %v1133
      %v1137 = vunpack.c.l.s4 1966171168
      %v1138 = vunpack.c.0.s8 %v1137
      %v1139 = vlaneseq
      %v1140 = vshrl.u32 %v1139, 7
      %v1141 = vsub.s32 %v1138, %v1140
      %v1142 = vrot.slane %v1126, %v1141
      %v1144 = vunpack.c.l.s4 1966171168
      %v1145 = vunpack.c.0.s8 %v1144
      %v1146 = vlaneseq
      %v1147 = vshrl.u32 %v1146, 7
      %v1148 = vsub.s32 %v1145, %v1147
      %v1149 = vrot.slane %v1133, %v1148
      %v1151 = vunpack.c.l.s4 1966171168
      %v1152 = vunpack.c.0.s8 %v1151
      %v1153 = vlaneseq
      %v1154 = vshrl.u32 %v1153, 7
      %v1155 = vsub.s32 %v1152, %v1154
      %v1156 = vrot.slane %v1134, %v1155
      %v1158 = vunpack.c.l.s4 1966171168
      %v1159 = vunpack.c.0.s8 %v1158
      %v1160 = vlaneseq
      %v1161 = vshrl.u32 %v1160, 7
      %v1162 = vsub.s32 %v1159, %v1161
      %v1163 = vrot.slane %v1135, %v1162
      %v1164 = vcombine.high %v1142, %v1142
      %v1165 = vcombine.high %v1149, %v1149
      %v1166 = vcombine.high %v1156, %v1156
      %v1167 = vcombine.high %v850, %v850
      %v1169 = vunpack.c.l.s4 1966171168
      %v1170 = vunpack.c.0.s8 %v1169
      %v1171 = vlaneseq
      %v1172 = vshrl.u32 %v1171, 7
      %v1173 = vsub.s32 %v1170, %v1172
      %v1174 = vrot.slane %v850, %v1173
      %v1176 = vunpack.c.l.s4 1966171168
      %v1177 = vunpack.c.0.s8 %v1176
      %v1178 = vlaneseq
      %v1179 = vshrl.u32 %v1178, 7
      %v1180 = vsub.s32 %v1177, %v1179
      %v1181 = vrot.slane %v1167, %v1180
      %v1182 = vcombine.high %v1174, %v1174
      %v1183 = vcombine.high %v1181, %v1181
      %v1185 = vunpack.c.l.s4 1966171168
      %v1186 = vunpack.c.0.s8 %v1185
      %v1187 = vlaneseq
      %v1188 = vshrl.u32 %v1187, 7
      %v1189 = vsub.s32 %v1186, %v1188
      %v1190 = vrot.slane %v1174, %v1189
      %v1192 = vunpack.c.l.s4 1966171168
      %v1193 = vunpack.c.0.s8 %v1192
      %v1194 = vlaneseq
      %v1195 = vshrl.u32 %v1194, 7
      %v1196 = vsub.s32 %v1193, %v1195
      %v1197 = vrot.slane %v1181, %v1196
      %v1199 = vunpack.c.l.s4 1966171168
      %v1200 = vunpack.c.0.s8 %v1199
      %v1201 = vlaneseq
      %v1202 = vshrl.u32 %v1201, 7
      %v1203 = vsub.s32 %v1200, %v1202
      %v1204 = vrot.slane %v1182, %v1203
      %v1206 = vunpack.c.l.s4 1966171168
      %v1207 = vunpack.c.0.s8 %v1206
      %v1208 = vlaneseq
      %v1209 = vshrl.u32 %v1208, 7
      %v1210 = vsub.s32 %v1207, %v1209
      %v1211 = vrot.slane %v1183, %v1210
      %v1212 = vcombine.high %v1190, %v1190
      %v1213 = vcombine.high %v1197, %v1197
      %v1214 = vcombine.high %v1204, %v1204
      %v1215 = vcombine.high %v1211, %v1211
      %v1216 = vcombine.high %v851, %v851
      %v1218 = vunpack.c.l.s4 1966171168
      %v1219 = vunpack.c.0.s8 %v1218
      %v1220 = vlaneseq
      %v1221 = vshrl.u32 %v1220, 7
      %v1222 = vsub.s32 %v1219, %v1221
      %v1223 = vrot.slane %v851, %v1222
      %v1225 = vunpack.c.l.s4 1966171168
      %v1226 = vunpack.c.0.s8 %v1225
      %v1227 = vlaneseq
      %v1228 = vshrl.u32 %v1227, 7
      %v1229 = vsub.s32 %v1226, %v1228
      %v1230 = vrot.slane %v1216, %v1229
      %v1231 = vcombine.high %v1223, %v1223
      %v1232 = vcombine.high %v1230, %v1230
      %v1234 = vunpack.c.l.s4 1966171168
      %v1235 = vunpack.c.0.s8 %v1234
      %v1236 = vlaneseq
      %v1237 = vshrl.u32 %v1236, 7
      %v1238 = vsub.s32 %v1235, %v1237
      %v1239 = vrot.slane %v1223, %v1238
      %v1241 = vunpack.c.l.s4 1966171168
      %v1242 = vunpack.c.0.s8 %v1241
      %v1243 = vlaneseq
      %v1244 = vshrl.u32 %v1243, 7
      %v1245 = vsub.s32 %v1242, %v1244
      %v1246 = vrot.slane %v1230, %v1245
      %v1248 = vunpack.c.l.s4 1966171168
      %v1249 = vunpack.c.0.s8 %v1248
      %v1250 = vlaneseq
      %v1251 = vshrl.u32 %v1250, 7
      %v1252 = vsub.s32 %v1249, %v1251
      %v1253 = vrot.slane %v1231, %v1252
      %v1255 = vunpack.c.l.s4 1966171168
      %v1256 = vunpack.c.0.s8 %v1255
      %v1257 = vlaneseq
      %v1258 = vshrl.u32 %v1257, 7
      %v1259 = vsub.s32 %v1256, %v1258
      %v1260 = vrot.slane %v1232, %v1259
      %v1261 = vcombine.high %v1239, %v1239
      %v1262 = vcombine.high %v1246, %v1246
      %v1263 = vcombine.high %v1253, %v1253
      %v1264 = vcombine.high %v852, %v852
      %v1266 = vunpack.c.l.s4 1966171168
      %v1267 = vunpack.c.0.s8 %v1266
      %v1268 = vlaneseq
      %v1269 = vshrl.u32 %v1268, 7
      %v1270 = vsub.s32 %v1267, %v1269
      %v1271 = vrot.slane %v852, %v1270
      %v1273 = vunpack.c.l.s4 1966171168
      %v1274 = vunpack.c.0.s8 %v1273
      %v1275 = vlaneseq
      %v1276 = vshrl.u32 %v1275, 7
      %v1277 = vsub.s32 %v1274, %v1276
      %v1278 = vrot.slane %v1264, %v1277
      %v1279 = vcombine.high %v1271, %v1271
      %v1280 = vcombine.high %v1278, %v1278
      %v1282 = vunpack.c.l.s4 1966171168
      %v1283 = vunpack.c.0.s8 %v1282
      %v1284 = vlaneseq
      %v1285 = vshrl.u32 %v1284, 7
      %v1286 = vsub.s32 %v1283, %v1285
      %v1287 = vrot.slane %v1271, %v1286
      %v1289 = vunpack.c.l.s4 1966171168
      %v1290 = vunpack.c.0.s8 %v1289
      %v1291 = vlaneseq
      %v1292 = vshrl.u32 %v1291, 7
      %v1293 = vsub.s32 %v1290, %v1292
      %v1294 = vrot.slane %v1278, %v1293
      %v1296 = vunpack.c.l.s4 1966171168
      %v1297 = vunpack.c.0.s8 %v1296
      %v1298 = vlaneseq
      %v1299 = vshrl.u32 %v1298, 7
      %v1300 = vsub.s32 %v1297, %v1299
      %v1301 = vrot.slane %v1279, %v1300
      %v1303 = vunpack.c.l.s4 1966171168
      %v1304 = vunpack.c.0.s8 %v1303
      %v1305 = vlaneseq
      %v1306 = vshrl.u32 %v1305, 7
      %v1307 = vsub.s32 %v1304, %v1306
      %v1308 = vrot.slane %v1280, %v1307
      %v1309 = vcombine.high %v1287, %v1287
      %v1310 = vcombine.high %v1294, %v1294
      %v1311 = vcombine.high %v1301, %v1301
      %v1312 = vcombine.high %v1308, %v1308
      %v1313 = vcombine.high %v853, %v853
      %v1315 = vunpack.c.l.s4 1966171168
      %v1316 = vunpack.c.0.s8 %v1315
      %v1317 = vlaneseq
      %v1318 = vshrl.u32 %v1317, 7
      %v1319 = vsub.s32 %v1316, %v1318
      %v1320 = vrot.slane %v853, %v1319
      %v1322 = vunpack.c.l.s4 1966171168
      %v1323 = vunpack.c.0.s8 %v1322
      %v1324 = vlaneseq
      %v1325 = vshrl.u32 %v1324, 7
      %v1326 = vsub.s32 %v1323, %v1325
      %v1327 = vrot.slane %v1313, %v1326
      %v1328 = vcombine.high %v1320, %v1320
      %v1329 = vcombine.high %v1327, %v1327
      %v1331 = vunpack.c.l.s4 1966171168
      %v1332 = vunpack.c.0.s8 %v1331
      %v1333 = vlaneseq
      %v1334 = vshrl.u32 %v1333, 7
      %v1335 = vsub.s32 %v1332, %v1334
      %v1336 = vrot.slane %v1320, %v1335
      %v1338 = vunpack.c.l.s4 1966171168
      %v1339 = vunpack.c.0.s8 %v1338
      %v1340 = vlaneseq
      %v1341 = vshrl.u32 %v1340, 7
      %v1342 = vsub.s32 %v1339, %v1341
      %v1343 = vrot.slane %v1327, %v1342
      %v1345 = vunpack.c.l.s4 1966171168
      %v1346 = vunpack.c.0.s8 %v1345
      %v1347 = vlaneseq
      %v1348 = vshrl.u32 %v1347, 7
      %v1349 = vsub.s32 %v1346, %v1348
      %v1350 = vrot.slane %v1328, %v1349
      %v1352 = vunpack.c.l.s4 1966171168
      %v1353 = vunpack.c.0.s8 %v1352
      %v1354 = vlaneseq
      %v1355 = vshrl.u32 %v1354, 7
      %v1356 = vsub.s32 %v1353, %v1355
      %v1357 = vrot.slane %v1329, %v1356
      %v1358 = vcombine.high %v1336, %v1336
      %v1359 = vcombine.high %v1343, %v1343
      %v1360 = vcombine.high %v1350, %v1350
      %v1361 = vcombine.high %v854, %v854
      %v1363 = vunpack.c.l.s4 1966171168
      %v1364 = vunpack.c.0.s8 %v1363
      %v1365 = vlaneseq
      %v1366 = vshrl.u32 %v1365, 7
      %v1367 = vsub.s32 %v1364, %v1366
      %v1368 = vrot.slane %v854, %v1367
      %v1370 = vunpack.c.l.s4 1966171168
      %v1371 = vunpack.c.0.s8 %v1370
      %v1372 = vlaneseq
      %v1373 = vshrl.u32 %v1372, 7
      %v1374 = vsub.s32 %v1371, %v1373
      %v1375 = vrot.slane %v1361, %v1374
      %v1376 = vcombine.high %v1368, %v1368
      %v1377 = vcombine.high %v1375, %v1375
      %v1379 = vunpack.c.l.s4 1966171168
      %v1380 = vunpack.c.0.s8 %v1379
      %v1381 = vlaneseq
      %v1382 = vshrl.u32 %v1381, 7
      %v1383 = vsub.s32 %v1380, %v1382
      %v1384 = vrot.slane %v1368, %v1383
      %v1386 = vunpack.c.l.s4 1966171168
      %v1387 = vunpack.c.0.s8 %v1386
      %v1388 = vlaneseq
      %v1389 = vshrl.u32 %v1388, 7
      %v1390 = vsub.s32 %v1387, %v1389
      %v1391 = vrot.slane %v1375, %v1390
      %v1393 = vunpack.c.l.s4 1966171168
      %v1394 = vunpack.c.0.s8 %v1393
      %v1395 = vlaneseq
      %v1396 = vshrl.u32 %v1395, 7
      %v1397 = vsub.s32 %v1394, %v1396
      %v1398 = vrot.slane %v1376, %v1397
      %v1400 = vunpack.c.l.s4 1966171168
      %v1401 = vunpack.c.0.s8 %v1400
      %v1402 = vlaneseq
      %v1403 = vshrl.u32 %v1402, 7
      %v1404 = vsub.s32 %v1401, %v1403
      %v1405 = vrot.slane %v1377, %v1404
      %v1406 = vcombine.high %v1384, %v1384
      %v1407 = vcombine.high %v1391, %v1391
      %v1408 = vcombine.high %v1398, %v1398
      %v1409 = vcombine.high %v1405, %v1405
      %v1410 = vcombine.high %v855, %v855
      %v1412 = vunpack.c.l.s4 1966171168
      %v1413 = vunpack.c.0.s8 %v1412
      %v1414 = vlaneseq
      %v1415 = vshrl.u32 %v1414, 7
      %v1416 = vsub.s32 %v1413, %v1415
      %v1417 = vrot.slane %v855, %v1416
      %v1419 = vunpack.c.l.s4 1966171168
      %v1420 = vunpack.c.0.s8 %v1419
      %v1421 = vlaneseq
      %v1422 = vshrl.u32 %v1421, 7
      %v1423 = vsub.s32 %v1420, %v1422
      %v1424 = vrot.slane %v1410, %v1423
      %v1425 = vcombine.high %v1417, %v1417
      %v1426 = vcombine.high %v1424, %v1424
      %v1428 = vunpack.c.l.s4 1966171168
      %v1429 = vunpack.c.0.s8 %v1428
      %v1430 = vlaneseq
      %v1431 = vshrl.u32 %v1430, 7
      %v1432 = vsub.s32 %v1429, %v1431
      %v1433 = vrot.slane %v1417, %v1432
      %v1435 = vunpack.c.l.s4 1966171168
      %v1436 = vunpack.c.0.s8 %v1435
      %v1437 = vlaneseq
      %v1438 = vshrl.u32 %v1437, 7
      %v1439 = vsub.s32 %v1436, %v1438
      %v1440 = vrot.slane %v1424, %v1439
      %v1442 = vunpack.c.l.s4 1966171168
      %v1443 = vunpack.c.0.s8 %v1442
      %v1444 = vlaneseq
      %v1445 = vshrl.u32 %v1444, 7
      %v1446 = vsub.s32 %v1443, %v1445
      %v1447 = vrot.slane %v1425, %v1446
      %v1449 = vunpack.c.l.s4 1966171168
      %v1450 = vunpack.c.0.s8 %v1449
      %v1451 = vlaneseq
      %v1452 = vshrl.u32 %v1451, 7
      %v1453 = vsub.s32 %v1450, %v1452
      %v1454 = vrot.slane %v1426, %v1453
      %v1455 = vcombine.high %v1433, %v1433
      %v1456 = vcombine.high %v1440, %v1440
      %v1457 = vcombine.high %v1447, %v1447
      %v1458 = vcombine.high %v856, %v856
      %v1460 = vunpack.c.l.s4 1966171168
      %v1461 = vunpack.c.0.s8 %v1460
      %v1462 = vlaneseq
      %v1463 = vshrl.u32 %v1462, 7
      %v1464 = vsub.s32 %v1461, %v1463
      %v1465 = vrot.slane %v856, %v1464
      %v1467 = vunpack.c.l.s4 1966171168
      %v1468 = vunpack.c.0.s8 %v1467
      %v1469 = vlaneseq
      %v1470 = vshrl.u32 %v1469, 7
      %v1471 = vsub.s32 %v1468, %v1470
      %v1472 = vrot.slane %v1458, %v1471
      %v1473 = vcombine.high %v1465, %v1465
      %v1474 = vcombine.high %v1472, %v1472
      %v1476 = vunpack.c.l.s4 1966171168
      %v1477 = vunpack.c.0.s8 %v1476
      %v1478 = vlaneseq
      %v1479 = vshrl.u32 %v1478, 7
      %v1480 = vsub.s32 %v1477, %v1479
      %v1481 = vrot.slane %v1465, %v1480
      %v1483 = vunpack.c.l.s4 1966171168
      %v1484 = vunpack.c.0.s8 %v1483
      %v1485 = vlaneseq
      %v1486 = vshrl.u32 %v1485, 7
      %v1487 = vsub.s32 %v1484, %v1486
      %v1488 = vrot.slane %v1472, %v1487
      %v1490 = vunpack.c.l.s4 1966171168
      %v1491 = vunpack.c.0.s8 %v1490
      %v1492 = vlaneseq
      %v1493 = vshrl.u32 %v1492, 7
      %v1494 = vsub.s32 %v1491, %v1493
      %v1495 = vrot.slane %v1473, %v1494
      %v1497 = vunpack.c.l.s4 1966171168
      %v1498 = vunpack.c.0.s8 %v1497
      %v1499 = vlaneseq
      %v1500 = vshrl.u32 %v1499, 7
      %v1501 = vsub.s32 %v1498, %v1500
      %v1502 = vrot.slane %v1474, %v1501
      %v1503 = vcombine.high %v1481, %v1481
      %v1504 = vcombine.high %v1488, %v1488
      %v1505 = vcombine.high %v1495, %v1495
      %v1506 = vcombine.high %v1502, %v1502
      %v1507 = vcombine.high %v857, %v857
      %v1509 = vunpack.c.l.s4 1966171168
      %v1510 = vunpack.c.0.s8 %v1509
      %v1511 = vlaneseq
      %v1512 = vshrl.u32 %v1511, 7
      %v1513 = vsub.s32 %v1510, %v1512
      %v1514 = vrot.slane %v857, %v1513
      %v1516 = vunpack.c.l.s4 1966171168
      %v1517 = vunpack.c.0.s8 %v1516
      %v1518 = vlaneseq
      %v1519 = vshrl.u32 %v1518, 7
      %v1520 = vsub.s32 %v1517, %v1519
      %v1521 = vrot.slane %v1507, %v1520
      %v1522 = vcombine.high %v1514, %v1514
      %v1523 = vcombine.high %v1521, %v1521
      %v1525 = vunpack.c.l.s4 1966171168
      %v1526 = vunpack.c.0.s8 %v1525
      %v1527 = vlaneseq
      %v1528 = vshrl.u32 %v1527, 7
      %v1529 = vsub.s32 %v1526, %v1528
      %v1530 = vrot.slane %v1514, %v1529
      %v1532 = vunpack.c.l.s4 1966171168
      %v1533 = vunpack.c.0.s8 %v1532
      %v1534 = vlaneseq
      %v1535 = vshrl.u32 %v1534, 7
      %v1536 = vsub.s32 %v1533, %v1535
      %v1537 = vrot.slane %v1521, %v1536
      %v1539 = vunpack.c.l.s4 1966171168
      %v1540 = vunpack.c.0.s8 %v1539
      %v1541 = vlaneseq
      %v1542 = vshrl.u32 %v1541, 7
      %v1543 = vsub.s32 %v1540, %v1542
      %v1544 = vrot.slane %v1522, %v1543
      %v1546 = vunpack.c.l.s4 1966171168
      %v1547 = vunpack.c.0.s8 %v1546
      %v1548 = vlaneseq
      %v1549 = vshrl.u32 %v1548, 7
      %v1550 = vsub.s32 %v1547, %v1549
      %v1551 = vrot.slane %v1523, %v1550
      %v1552 = vcombine.high %v1530, %v1530
      %v1553 = vcombine.high %v1537, %v1537
      %v1554 = vcombine.high %v1544, %v1544
      %v1555 = vcombine.high %v858, %v858
      %v1557 = vunpack.c.l.s4 1966171168
      %v1558 = vunpack.c.0.s8 %v1557
      %v1559 = vlaneseq
      %v1560 = vshrl.u32 %v1559, 7
      %v1561 = vsub.s32 %v1558, %v1560
      %v1562 = vrot.slane %v858, %v1561
      %v1564 = vunpack.c.l.s4 1966171168
      %v1565 = vunpack.c.0.s8 %v1564
      %v1566 = vlaneseq
      %v1567 = vshrl.u32 %v1566, 7
      %v1568 = vsub.s32 %v1565, %v1567
      %v1569 = vrot.slane %v1555, %v1568
      %v1570 = vcombine.high %v1562, %v1562
      %v1571 = vcombine.high %v1569, %v1569
      %v1573 = vunpack.c.l.s4 1966171168
      %v1574 = vunpack.c.0.s8 %v1573
      %v1575 = vlaneseq
      %v1576 = vshrl.u32 %v1575, 7
      %v1577 = vsub.s32 %v1574, %v1576
      %v1578 = vrot.slane %v1562, %v1577
      %v1580 = vunpack.c.l.s4 1966171168
      %v1581 = vunpack.c.0.s8 %v1580
      %v1582 = vlaneseq
      %v1583 = vshrl.u32 %v1582, 7
      %v1584 = vsub.s32 %v1581, %v1583
      %v1585 = vrot.slane %v1569, %v1584
      %v1587 = vunpack.c.l.s4 1966171168
      %v1588 = vunpack.c.0.s8 %v1587
      %v1589 = vlaneseq
      %v1590 = vshrl.u32 %v1589, 7
      %v1591 = vsub.s32 %v1588, %v1590
      %v1592 = vrot.slane %v1570, %v1591
      %v1594 = vunpack.c.l.s4 1966171168
      %v1595 = vunpack.c.0.s8 %v1594
      %v1596 = vlaneseq
      %v1597 = vshrl.u32 %v1596, 7
      %v1598 = vsub.s32 %v1595, %v1597
      %v1599 = vrot.slane %v1571, %v1598
      %v1600 = vcombine.high %v1578, %v1578
      %v1601 = vcombine.high %v1585, %v1585
      %v1602 = vcombine.high %v1592, %v1592
      %v1603 = vcombine.high %v1599, %v1599
      %v1604 = vcombine.high %v859, %v859
      %v1606 = vunpack.c.l.s4 1966171168
      %v1607 = vunpack.c.0.s8 %v1606
      %v1608 = vlaneseq
      %v1609 = vshrl.u32 %v1608, 7
      %v1610 = vsub.s32 %v1607, %v1609
      %v1611 = vrot.slane %v859, %v1610
      %v1613 = vunpack.c.l.s4 1966171168
      %v1614 = vunpack.c.0.s8 %v1613
      %v1615 = vlaneseq
      %v1616 = vshrl.u32 %v1615, 7
      %v1617 = vsub.s32 %v1614, %v1616
      %v1618 = vrot.slane %v1604, %v1617
      %v1619 = vcombine.high %v1611, %v1611
      %v1620 = vcombine.high %v1618, %v1618
      %v1622 = vunpack.c.l.s4 1966171168
      %v1623 = vunpack.c.0.s8 %v1622
      %v1624 = vlaneseq
      %v1625 = vshrl.u32 %v1624, 7
      %v1626 = vsub.s32 %v1623, %v1625
      %v1627 = vrot.slane %v1611, %v1626
      %v1629 = vunpack.c.l.s4 1966171168
      %v1630 = vunpack.c.0.s8 %v1629
      %v1631 = vlaneseq
      %v1632 = vshrl.u32 %v1631, 7
      %v1633 = vsub.s32 %v1630, %v1632
      %v1634 = vrot.slane %v1618, %v1633
      %v1636 = vunpack.c.l.s4 1966171168
      %v1637 = vunpack.c.0.s8 %v1636
      %v1638 = vlaneseq
      %v1639 = vshrl.u32 %v1638, 7
      %v1640 = vsub.s32 %v1637, %v1639
      %v1641 = vrot.slane %v1619, %v1640
      %v1643 = vunpack.c.l.s4 1966171168
      %v1644 = vunpack.c.0.s8 %v1643
      %v1645 = vlaneseq
      %v1646 = vshrl.u32 %v1645, 7
      %v1647 = vsub.s32 %v1644, %v1646
      %v1648 = vrot.slane %v1620, %v1647
      %v1649 = vcombine.high %v1627, %v1627
      %v1650 = vcombine.high %v1634, %v1634
      %v1651 = vcombine.high %v1641, %v1641
      %v1652 = vcombine.low %v899, %v913
      %v1654 = vunpack.c.l.s4 1966171168
      %v1655 = vunpack.c.0.s8 %v1654
      %v1656 = vlaneseq
      %v1657 = vshrl.u32 %v1656, 7
      %v1658 = vsub.s32 %v1655, %v1657
      %v1659 = vrot.slane %v1652, %v1658
      %v1661 = vunpack.c.l.s4 1966171168
      %v1662 = vunpack.c.0.s8 %v1661
      %v1663 = vlaneseq
      %v1664 = vshrl.u32 %v1663, 7
      %v1665 = vsub.s32 %v1662, %v1664
      %v1666 = vrot.slane %v921, %v1665
      %v1667 = vcombine.low %v1659, %v1666
      %v1669 = vunpack.c.l.s4 1966171168
      %v1670 = vunpack.c.0.s8 %v1669
      %v1671 = vlaneseq
      %v1672 = vshrl.u32 %v1671, 7
      %v1673 = vsub.s32 %v1670, %v1672
      %v1674 = vrot.slane %v1667, %v1673
      %v1675 = vcombine.low %v923, %v906
      %v1677 = vunpack.c.l.s4 1966171168
      %v1678 = vunpack.c.0.s8 %v1677
      %v1679 = vlaneseq
      %v1680 = vshrl.u32 %v1679, 7
      %v1681 = vsub.s32 %v1678, %v1680
      %v1682 = vrot.slane %v1675, %v1681
      %v1684 = vunpack.c.l.s4 1966171168
      %v1685 = vunpack.c.0.s8 %v1684
      %v1686 = vlaneseq
      %v1687 = vshrl.u32 %v1686, 7
      %v1688 = vsub.s32 %v1685, %v1687
      %v1689 = vrot.slane %v920, %v1688
      %v1690 = vcombine.low %v1682, %v1689
      %v1692 = vunpack.c.l.s4 1966171168
      %v1693 = vunpack.c.0.s8 %v1692
      %v1694 = vlaneseq
      %v1695 = vshrl.u32 %v1694, 7
      %v1696 = vsub.s32 %v1693, %v1695
      %v1697 = vrot.slane %v1690, %v1696
      %v1698 = vcombine.low %v922, %v924
      %v1700 = vunpack.c.l.s4 1966171168
      %v1701 = vunpack.c.0.s8 %v1700
      %v1702 = vlaneseq
      %v1703 = vshrl.u32 %v1702, 7
      %v1704 = vsub.s32 %v1701, %v1703
      %v1705 = vrot.slane %v1698, %v1704
      %v1707 = vunpack.c.l.s4 1966171168
      %v1708 = vunpack.c.0.s8 %v1707
      %v1709 = vlaneseq
      %v1710 = vshrl.u32 %v1709, 7
      %v1711 = vsub.s32 %v1708, %v1710
      %v1712 = vrot.slane %v948, %v1711
      %v1713 = vcombine.low %v1705, %v1712
      %v1715 = vunpack.c.l.s4 1966171168
      %v1716 = vunpack.c.0.s8 %v1715
      %v1717 = vlaneseq
      %v1718 = vshrl.u32 %v1717, 7
      %v1719 = vsub.s32 %v1716, %v1718
      %v1720 = vrot.slane %v1713, %v1719
      %v1721 = vcombine.low %v962, %v970
      %v1723 = vunpack.c.l.s4 1966171168
      %v1724 = vunpack.c.0.s8 %v1723
      %v1725 = vlaneseq
      %v1726 = vshrl.u32 %v1725, 7
      %v1727 = vsub.s32 %v1724, %v1726
      %v1728 = vrot.slane %v1721, %v1727
      %v1730 = vunpack.c.l.s4 1966171168
      %v1731 = vunpack.c.0.s8 %v1730
      %v1732 = vlaneseq
      %v1733 = vshrl.u32 %v1732, 7
      %v1734 = vsub.s32 %v1731, %v1733
      %v1735 = vrot.slane %v972, %v1734
      %v1736 = vcombine.low %v1728, %v1735
      %v1738 = vunpack.c.l.s4 1966171168
      %v1739 = vunpack.c.0.s8 %v1738
      %v1740 = vlaneseq
      %v1741 = vshrl.u32 %v1740, 7
      %v1742 = vsub.s32 %v1739, %v1741
      %v1743 = vrot.slane %v1736, %v1742
      %v1744 = vcombine.low %v955, %v969
      %v1746 = vunpack.c.l.s4 1966171168
      %v1747 = vunpack.c.0.s8 %v1746
      %v1748 = vlaneseq
      %v1749 = vshrl.u32 %v1748, 7
      %v1750 = vsub.s32 %v1747, %v1749
      %v1751 = vrot.slane %v1744, %v1750
      %v1753 = vunpack.c.l.s4 1966171168
      %v1754 = vunpack.c.0.s8 %v1753
      %v1755 = vlaneseq
      %v1756 = vshrl.u32 %v1755, 7
      %v1757 = vsub.s32 %v1754, %v1756
      %v1758 = vrot.slane %v971, %v1757
      %v1759 = vcombine.low %v1751, %v1758
      %v1761 = vunpack.c.l.s4 1966171168
      %v1762 = vunpack.c.0.s8 %v1761
      %v1763 = vlaneseq
      %v1764 = vshrl.u32 %v1763, 7
      %v1765 = vsub.s32 %v1762, %v1764
      %v1766 = vrot.slane %v1759, %v1765
      %v1767 = vcombine.low %v996, %v1010
      %v1769 = vunpack.c.l.s4 1966171168
      %v1770 = vunpack.c.0.s8 %v1769
      %v1771 = vlaneseq
      %v1772 = vshrl.u32 %v1771, 7
      %v1773 = vsub.s32 %v1770, %v1772
      %v1774 = vrot.slane %v1767, %v1773
      %v1776 = vunpack.c.l.s4 1966171168
      %v1777 = vunpack.c.0.s8 %v1776
      %v1778 = vlaneseq
      %v1779 = vshrl.u32 %v1778, 7
      %v1780 = vsub.s32 %v1777, %v1779
      %v1781 = vrot.slane %v1018, %v1780
      %v1782 = vcombine.low %v1774, %v1781
      %v1784 = vunpack.c.l.s4 1966171168
      %v1785 = vunpack.c.0.s8 %v1784
      %v1786 = vlaneseq
      %v1787 = vshrl.u32 %v1786, 7
      %v1788 = vsub.s32 %v1785, %v1787
      %v1789 = vrot.slane %v1782, %v1788
      %v1790 = vcombine.low %v1020, %v1003
      %v1792 = vunpack.c.l.s4 1966171168
      %v1793 = vunpack.c.0.s8 %v1792
      %v1794 = vlaneseq
      %v1795 = vshrl.u32 %v1794, 7
      %v1796 = vsub.s32 %v1793, %v1795
      %v1797 = vrot.slane %v1790, %v1796
      %v1799 = vunpack.c.l.s4 1966171168
      %v1800 = vunpack.c.0.s8 %v1799
      %v1801 = vlaneseq
      %v1802 = vshrl.u32 %v1801, 7
      %v1803 = vsub.s32 %v1800, %v1802
      %v1804 = vrot.slane %v1017, %v1803
      %v1805 = vcombine.low %v1797, %v1804
      %v1807 = vunpack.c.l.s4 1966171168
      %v1808 = vunpack.c.0.s8 %v1807
      %v1809 = vlaneseq
      %v1810 = vshrl.u32 %v1809, 7
      %v1811 = vsub.s32 %v1808, %v1810
      %v1812 = vrot.slane %v1805, %v1811
      %v1813 = vcombine.low %v1019, %v1021
      %v1815 = vunpack.c.l.s4 1966171168
      %v1816 = vunpack.c.0.s8 %v1815
      %v1817 = vlaneseq
      %v1818 = vshrl.u32 %v1817, 7
      %v1819 = vsub.s32 %v1816, %v1818
      %v1820 = vrot.slane %v1813, %v1819
      %v1822 = vunpack.c.l.s4 1966171168
      %v1823 = vunpack.c.0.s8 %v1822
      %v1824 = vlaneseq
      %v1825 = vshrl.u32 %v1824, 7
      %v1826 = vsub.s32 %v1823, %v1825
      %v1827 = vrot.slane %v1045, %v1826
      %v1828 = vcombine.low %v1820, %v1827
      %v1830 = vunpack.c.l.s4 1966171168
      %v1831 = vunpack.c.0.s8 %v1830
      %v1832 = vlaneseq
      %v1833 = vshrl.u32 %v1832, 7
      %v1834 = vsub.s32 %v1831, %v1833
      %v1835 = vrot.slane %v1828, %v1834
      %v1836 = vcombine.low %v1059, %v1067
      %v1838 = vunpack.c.l.s4 1966171168
      %v1839 = vunpack.c.0.s8 %v1838
      %v1840 = vlaneseq
      %v1841 = vshrl.u32 %v1840, 7
      %v1842 = vsub.s32 %v1839, %v1841
      %v1843 = vrot.slane %v1836, %v1842
      %v1845 = vunpack.c.l.s4 1966171168
      %v1846 = vunpack.c.0.s8 %v1845
      %v1847 = vlaneseq
      %v1848 = vshrl.u32 %v1847, 7
      %v1849 = vsub.s32 %v1846, %v1848
      %v1850 = vrot.slane %v1069, %v1849
      %v1851 = vcombine.low %v1843, %v1850
      %v1853 = vunpack.c.l.s4 1966171168
      %v1854 = vunpack.c.0.s8 %v1853
      %v1855 = vlaneseq
      %v1856 = vshrl.u32 %v1855, 7
      %v1857 = vsub.s32 %v1854, %v1856
      %v1858 = vrot.slane %v1851, %v1857
      %v1859 = vcombine.low %v1052, %v1066
      %v1861 = vunpack.c.l.s4 1966171168
      %v1862 = vunpack.c.0.s8 %v1861
      %v1863 = vlaneseq
      %v1864 = vshrl.u32 %v1863, 7
      %v1865 = vsub.s32 %v1862, %v1864
      %v1866 = vrot.slane %v1859, %v1865
      %v1868 = vunpack.c.l.s4 1966171168
      %v1869 = vunpack.c.0.s8 %v1868
      %v1870 = vlaneseq
      %v1871 = vshrl.u32 %v1870, 7
      %v1872 = vsub.s32 %v1869, %v1871
      %v1873 = vrot.slane %v1068, %v1872
      %v1874 = vcombine.low %v1866, %v1873
      %v1876 = vunpack.c.l.s4 1966171168
      %v1877 = vunpack.c.0.s8 %v1876
      %v1878 = vlaneseq
      %v1879 = vshrl.u32 %v1878, 7
      %v1880 = vsub.s32 %v1877, %v1879
      %v1881 = vrot.slane %v1874, %v1880
      %v1882 = vcombine.low %v1093, %v1107
      %v1884 = vunpack.c.l.s4 1966171168
      %v1885 = vunpack.c.0.s8 %v1884
      %v1886 = vlaneseq
      %v1887 = vshrl.u32 %v1886, 7
      %v1888 = vsub.s32 %v1885, %v1887
      %v1889 = vrot.slane %v1882, %v1888
      %v1891 = vunpack.c.l.s4 1966171168
      %v1892 = vunpack.c.0.s8 %v1891
      %v1893 = vlaneseq
      %v1894 = vshrl.u32 %v1893, 7
      %v1895 = vsub.s32 %v1892, %v1894
      %v1896 = vrot.slane %v1115, %v1895
      %v1897 = vcombine.low %v1889, %v1896
      %v1899 = vunpack.c.l.s4 1966171168
      %v1900 = vunpack.c.0.s8 %v1899
      %v1901 = vlaneseq
      %v1902 = vshrl.u32 %v1901, 7
      %v1903 = vsub.s32 %v1900, %v1902
      %v1904 = vrot.slane %v1897, %v1903
      %v1905 = vcombine.low %v1117, %v1100
      %v1907 = vunpack.c.l.s4 1966171168
      %v1908 = vunpack.c.0.s8 %v1907
      %v1909 = vlaneseq
      %v1910 = vshrl.u32 %v1909, 7
      %v1911 = vsub.s32 %v1908, %v1910
      %v1912 = vrot.slane %v1905, %v1911
      %v1914 = vunpack.c.l.s4 1966171168
      %v1915 = vunpack.c.0.s8 %v1914
      %v1916 = vlaneseq
      %v1917 = vshrl.u32 %v1916, 7
      %v1918 = vsub.s32 %v1915, %v1917
      %v1919 = vrot.slane %v1114, %v1918
      %v1920 = vcombine.low %v1912, %v1919
      %v1922 = vunpack.c.l.s4 1966171168
      %v1923 = vunpack.c.0.s8 %v1922
      %v1924 = vlaneseq
      %v1925 = vshrl.u32 %v1924, 7
      %v1926 = vsub.s32 %v1923, %v1925
      %v1927 = vrot.slane %v1920, %v1926
      %v1928 = vcombine.low %v1116, %v1118
      %v1930 = vunpack.c.l.s4 1966171168
      %v1931 = vunpack.c.0.s8 %v1930
      %v1932 = vlaneseq
      %v1933 = vshrl.u32 %v1932, 7
      %v1934 = vsub.s32 %v1931, %v1933
      %v1935 = vrot.slane %v1928, %v1934
      %v1937 = vunpack.c.l.s4 1966171168
      %v1938 = vunpack.c.0.s8 %v1937
      %v1939 = vlaneseq
      %v1940 = vshrl.u32 %v1939, 7
      %v1941 = vsub.s32 %v1938, %v1940
      %v1942 = vrot.slane %v1142, %v1941
      %v1943 = vcombine.low %v1935, %v1942
      %v1945 = vunpack.c.l.s4 1966171168
      %v1946 = vunpack.c.0.s8 %v1945
      %v1947 = vlaneseq
      %v1948 = vshrl.u32 %v1947, 7
      %v1949 = vsub.s32 %v1946, %v1948
      %v1950 = vrot.slane %v1943, %v1949
      %v1951 = vcombine.low %v1156, %v1164
      %v1953 = vunpack.c.l.s4 1966171168
      %v1954 = vunpack.c.0.s8 %v1953
      %v1955 = vlaneseq
      %v1956 = vshrl.u32 %v1955, 7
      %v1957 = vsub.s32 %v1954, %v1956
      %v1958 = vrot.slane %v1951, %v1957
      %v1960 = vunpack.c.l.s4 1966171168
      %v1961 = vunpack.c.0.s8 %v1960
      %v1962 = vlaneseq
      %v1963 = vshrl.u32 %v1962, 7
      %v1964 = vsub.s32 %v1961, %v1963
      %v1965 = vrot.slane %v1166, %v1964
      %v1966 = vcombine.low %v1958, %v1965
      %v1968 = vunpack.c.l.s4 1966171168
      %v1969 = vunpack.c.0.s8 %v1968
      %v1970 = vlaneseq
      %v1971 = vshrl.u32 %v1970, 7
      %v1972 = vsub.s32 %v1969, %v1971
      %v1973 = vrot.slane %v1966, %v1972
      %v1974 = vcombine.low %v1149, %v1163
      %v1976 = vunpack.c.l.s4 1966171168
      %v1977 = vunpack.c.0.s8 %v1976
      %v1978 = vlaneseq
      %v1979 = vshrl.u32 %v1978, 7
      %v1980 = vsub.s32 %v1977, %v1979
      %v1981 = vrot.slane %v1974, %v1980
      %v1983 = vunpack.c.l.s4 1966171168
      %v1984 = vunpack.c.0.s8 %v1983
      %v1985 = vlaneseq
      %v1986 = vshrl.u32 %v1985, 7
      %v1987 = vsub.s32 %v1984, %v1986
      %v1988 = vrot.slane %v1165, %v1987
      %v1989 = vcombine.low %v1981, %v1988
      %v1991 = vunpack.c.l.s4 1966171168
      %v1992 = vunpack.c.0.s8 %v1991
      %v1993 = vlaneseq
      %v1994 = vshrl.u32 %v1993, 7
      %v1995 = vsub.s32 %v1992, %v1994
      %v1996 = vrot.slane %v1989, %v1995
      %v1997 = vcombine.low %v1190, %v1204
      %v1999 = vunpack.c.l.s4 1966171168
      %v2000 = vunpack.c.0.s8 %v1999
      %v2001 = vlaneseq
      %v2002 = vshrl.u32 %v2001, 7
      %v2003 = vsub.s32 %v2000, %v2002
      %v2004 = vrot.slane %v1997, %v2003
      %v2006 = vunpack.c.l.s4 1966171168
      %v2007 = vunpack.c.0.s8 %v2006
      %v2008 = vlaneseq
      %v2009 = vshrl.u32 %v2008, 7
      %v2010 = vsub.s32 %v2007, %v2009
      %v2011 = vrot.slane %v1212, %v2010
      %v2012 = vcombine.low %v2004, %v2011
      %v2014 = vunpack.c.l.s4 1966171168
      %v2015 = vunpack.c.0.s8 %v2014
      %v2016 = vlaneseq
      %v2017 = vshrl.u32 %v2016, 7
      %v2018 = vsub.s32 %v2015, %v2017
      %v2019 = vrot.slane %v2012, %v2018
      %v2020 = vcombine.low %v1214, %v1197
      %v2022 = vunpack.c.l.s4 1966171168
      %v2023 = vunpack.c.0.s8 %v2022
      %v2024 = vlaneseq
      %v2025 = vshrl.u32 %v2024, 7
      %v2026 = vsub.s32 %v2023, %v2025
      %v2027 = vrot.slane %v2020, %v2026
      %v2029 = vunpack.c.l.s4 1966171168
      %v2030 = vunpack.c.0.s8 %v2029
      %v2031 = vlaneseq
      %v2032 = vshrl.u32 %v2031, 7
      %v2033 = vsub.s32 %v2030, %v2032
      %v2034 = vrot.slane %v1211, %v2033
      %v2035 = vcombine.low %v2027, %v2034
      %v2037 = vunpack.c.l.s4 1966171168
      %v2038 = vunpack.c.0.s8 %v2037
      %v2039 = vlaneseq
      %v2040 = vshrl.u32 %v2039, 7
      %v2041 = vsub.s32 %v2038, %v2040
      %v2042 = vrot.slane %v2035, %v2041
      %v2043 = vcombine.low %v1213, %v1215
      %v2045 = vunpack.c.l.s4 1966171168
      %v2046 = vunpack.c.0.s8 %v2045
      %v2047 = vlaneseq
      %v2048 = vshrl.u32 %v2047, 7
      %v2049 = vsub.s32 %v2046, %v2048
      %v2050 = vrot.slane %v2043, %v2049
      %v2052 = vunpack.c.l.s4 1966171168
      %v2053 = vunpack.c.0.s8 %v2052
      %v2054 = vlaneseq
      %v2055 = vshrl.u32 %v2054, 7
      %v2056 = vsub.s32 %v2053, %v2055
      %v2057 = vrot.slane %v1239, %v2056
      %v2058 = vcombine.low %v2050, %v2057
      %v2060 = vunpack.c.l.s4 1966171168
      %v2061 = vunpack.c.0.s8 %v2060
      %v2062 = vlaneseq
      %v2063 = vshrl.u32 %v2062, 7
      %v2064 = vsub.s32 %v2061, %v2063
      %v2065 = vrot.slane %v2058, %v2064
      %v2066 = vcombine.low %v1253, %v1261
      %v2068 = vunpack.c.l.s4 1966171168
      %v2069 = vunpack.c.0.s8 %v2068
      %v2070 = vlaneseq
      %v2071 = vshrl.u32 %v2070, 7
      %v2072 = vsub.s32 %v2069, %v2071
      %v2073 = vrot.slane %v2066, %v2072
      %v2075 = vunpack.c.l.s4 1966171168
      %v2076 = vunpack.c.0.s8 %v2075
      %v2077 = vlaneseq
      %v2078 = vshrl.u32 %v2077, 7
      %v2079 = vsub.s32 %v2076, %v2078
      %v2080 = vrot.slane %v1263, %v2079
      %v2081 = vcombine.low %v2073, %v2080
      %v2083 = vunpack.c.l.s4 1966171168
      %v2084 = vunpack.c.0.s8 %v2083
      %v2085 = vlaneseq
      %v2086 = vshrl.u32 %v2085, 7
      %v2087 = vsub.s32 %v2084, %v2086
      %v2088 = vrot.slane %v2081, %v2087
      %v2089 = vcombine.low %v1246, %v1260
      %v2091 = vunpack.c.l.s4 1966171168
      %v2092 = vunpack.c.0.s8 %v2091
      %v2093 = vlaneseq
      %v2094 = vshrl.u32 %v2093, 7
      %v2095 = vsub.s32 %v2092, %v2094
      %v2096 = vrot.slane %v2089, %v2095
      %v2098 = vunpack.c.l.s4 1966171168
      %v2099 = vunpack.c.0.s8 %v2098
      %v2100 = vlaneseq
      %v2101 = vshrl.u32 %v2100, 7
      %v2102 = vsub.s32 %v2099, %v2101
      %v2103 = vrot.slane %v1262, %v2102
      %v2104 = vcombine.low %v2096, %v2103
      %v2106 = vunpack.c.l.s4 1966171168
      %v2107 = vunpack.c.0.s8 %v2106
      %v2108 = vlaneseq
      %v2109 = vshrl.u32 %v2108, 7
      %v2110 = vsub.s32 %v2107, %v2109
      %v2111 = vrot.slane %v2104, %v2110
      %v2112 = vcombine.low %v1287, %v1301
      %v2114 = vunpack.c.l.s4 1966171168
      %v2115 = vunpack.c.0.s8 %v2114
      %v2116 = vlaneseq
      %v2117 = vshrl.u32 %v2116, 7
      %v2118 = vsub.s32 %v2115, %v2117
      %v2119 = vrot.slane %v2112, %v2118
      %v2121 = vunpack.c.l.s4 1966171168
      %v2122 = vunpack.c.0.s8 %v2121
      %v2123 = vlaneseq
      %v2124 = vshrl.u32 %v2123, 7
      %v2125 = vsub.s32 %v2122, %v2124
      %v2126 = vrot.slane %v1309, %v2125
      %v2127 = vcombine.low %v2119, %v2126
      %v2129 = vunpack.c.l.s4 1966171168
      %v2130 = vunpack.c.0.s8 %v2129
      %v2131 = vlaneseq
      %v2132 = vshrl.u32 %v2131, 7
      %v2133 = vsub.s32 %v2130, %v2132
      %v2134 = vrot.slane %v2127, %v2133
      %v2135 = vcombine.low %v1311, %v1294
      %v2137 = vunpack.c.l.s4 1966171168
      %v2138 = vunpack.c.0.s8 %v2137
      %v2139 = vlaneseq
      %v2140 = vshrl.u32 %v2139, 7
      %v2141 = vsub.s32 %v2138, %v2140
      %v2142 = vrot.slane %v2135, %v2141
      %v2144 = vunpack.c.l.s4 1966171168
      %v2145 = vunpack.c.0.s8 %v2144
      %v2146 = vlaneseq
      %v2147 = vshrl.u32 %v2146, 7
      %v2148 = vsub.s32 %v2145, %v2147
      %v2149 = vrot.slane %v1308, %v2148
      %v2150 = vcombine.low %v2142, %v2149
      %v2152 = vunpack.c.l.s4 1966171168
      %v2153 = vunpack.c.0.s8 %v2152
      %v2154 = vlaneseq
      %v2155 = vshrl.u32 %v2154, 7
      %v2156 = vsub.s32 %v2153, %v2155
      %v2157 = vrot.slane %v2150, %v2156
      %v2158 = vcombine.low %v1310, %v1312
      %v2160 = vunpack.c.l.s4 1966171168
      %v2161 = vunpack.c.0.s8 %v2160
      %v2162 = vlaneseq
      %v2163 = vshrl.u32 %v2162, 7
      %v2164 = vsub.s32 %v2161, %v2163
      %v2165 = vrot.slane %v2158, %v2164
      %v2167 = vunpack.c.l.s4 1966171168
      %v2168 = vunpack.c.0.s8 %v2167
      %v2169 = vlaneseq
      %v2170 = vshrl.u32 %v2169, 7
      %v2171 = vsub.s32 %v2168, %v2170
      %v2172 = vrot.slane %v1336, %v2171
      %v2173 = vcombine.low %v2165, %v2172
      %v2175 = vunpack.c.l.s4 1966171168
      %v2176 = vunpack.c.0.s8 %v2175
      %v2177 = vlaneseq
      %v2178 = vshrl.u32 %v2177, 7
      %v2179 = vsub.s32 %v2176, %v2178
      %v2180 = vrot.slane %v2173, %v2179
      %v2181 = vcombine.low %v1350, %v1358
      %v2183 = vunpack.c.l.s4 1966171168
      %v2184 = vunpack.c.0.s8 %v2183
      %v2185 = vlaneseq
      %v2186 = vshrl.u32 %v2185, 7
      %v2187 = vsub.s32 %v2184, %v2186
      %v2188 = vrot.slane %v2181, %v2187
      %v2190 = vunpack.c.l.s4 1966171168
      %v2191 = vunpack.c.0.s8 %v2190
      %v2192 = vlaneseq
      %v2193 = vshrl.u32 %v2192, 7
      %v2194 = vsub.s32 %v2191, %v2193
      %v2195 = vrot.slane %v1360, %v2194
      %v2196 = vcombine.low %v2188, %v2195
      %v2198 = vunpack.c.l.s4 1966171168
      %v2199 = vunpack.c.0.s8 %v2198
      %v2200 = vlaneseq
      %v2201 = vshrl.u32 %v2200, 7
      %v2202 = vsub.s32 %v2199, %v2201
      %v2203 = vrot.slane %v2196, %v2202
      %v2204 = vcombine.low %v1343, %v1357
      %v2206 = vunpack.c.l.s4 1966171168
      %v2207 = vunpack.c.0.s8 %v2206
      %v2208 = vlaneseq
      %v2209 = vshrl.u32 %v2208, 7
      %v2210 = vsub.s32 %v2207, %v2209
      %v2211 = vrot.slane %v2204, %v2210
      %v2213 = vunpack.c.l.s4 1966171168
      %v2214 = vunpack.c.0.s8 %v2213
      %v2215 = vlaneseq
      %v2216 = vshrl.u32 %v2215, 7
      %v2217 = vsub.s32 %v2214, %v2216
      %v2218 = vrot.slane %v1359, %v2217
      %v2219 = vcombine.low %v2211, %v2218
      %v2221 = vunpack.c.l.s4 1966171168
      %v2222 = vunpack.c.0.s8 %v2221
      %v2223 = vlaneseq
      %v2224 = vshrl.u32 %v2223, 7
      %v2225 = vsub.s32 %v2222, %v2224
      %v2226 = vrot.slane %v2219, %v2225
      %v2227 = vcombine.low %v1384, %v1398
      %v2229 = vunpack.c.l.s4 1966171168
      %v2230 = vunpack.c.0.s8 %v2229
      %v2231 = vlaneseq
      %v2232 = vshrl.u32 %v2231, 7
      %v2233 = vsub.s32 %v2230, %v2232
      %v2234 = vrot.slane %v2227, %v2233
      %v2236 = vunpack.c.l.s4 1966171168
      %v2237 = vunpack.c.0.s8 %v2236
      %v2238 = vlaneseq
      %v2239 = vshrl.u32 %v2238, 7
      %v2240 = vsub.s32 %v2237, %v2239
      %v2241 = vrot.slane %v1406, %v2240
      %v2242 = vcombine.low %v2234, %v2241
      %v2244 = vunpack.c.l.s4 1966171168
      %v2245 = vunpack.c.0.s8 %v2244
      %v2246 = vlaneseq
      %v2247 = vshrl.u32 %v2246, 7
      %v2248 = vsub.s32 %v2245, %v2247
      %v2249 = vrot.slane %v2242, %v2248
      %v2250 = vcombine.low %v1408, %v1391
      %v2252 = vunpack.c.l.s4 1966171168
      %v2253 = vunpack.c.0.s8 %v2252
      %v2254 = vlaneseq
      %v2255 = vshrl.u32 %v2254, 7
      %v2256 = vsub.s32 %v2253, %v2255
      %v2257 = vrot.slane %v2250, %v2256
      %v2259 = vunpack.c.l.s4 1966171168
      %v2260 = vunpack.c.0.s8 %v2259
      %v2261 = vlaneseq
      %v2262 = vshrl.u32 %v2261, 7
      %v2263 = vsub.s32 %v2260, %v2262
      %v2264 = vrot.slane %v1405, %v2263
      %v2265 = vcombine.low %v2257, %v2264
      %v2267 = vunpack.c.l.s4 1966171168
      %v2268 = vunpack.c.0.s8 %v2267
      %v2269 = vlaneseq
      %v2270 = vshrl.u32 %v2269, 7
      %v2271 = vsub.s32 %v2268, %v2270
      %v2272 = vrot.slane %v2265, %v2271
      %v2273 = vcombine.low %v1407, %v1409
      %v2275 = vunpack.c.l.s4 1966171168
      %v2276 = vunpack.c.0.s8 %v2275
      %v2277 = vlaneseq
      %v2278 = vshrl.u32 %v2277, 7
      %v2279 = vsub.s32 %v2276, %v2278
      %v2280 = vrot.slane %v2273, %v2279
      %v2282 = vunpack.c.l.s4 1966171168
      %v2283 = vunpack.c.0.s8 %v2282
      %v2284 = vlaneseq
      %v2285 = vshrl.u32 %v2284, 7
      %v2286 = vsub.s32 %v2283, %v2285
      %v2287 = vrot.slane %v1433, %v2286
      %v2288 = vcombine.low %v2280, %v2287
      %v2290 = vunpack.c.l.s4 1966171168
      %v2291 = vunpack.c.0.s8 %v2290
      %v2292 = vlaneseq
      %v2293 = vshrl.u32 %v2292, 7
      %v2294 = vsub.s32 %v2291, %v2293
      %v2295 = vrot.slane %v2288, %v2294
      %v2296 = vcombine.low %v1447, %v1455
      %v2298 = vunpack.c.l.s4 1966171168
      %v2299 = vunpack.c.0.s8 %v2298
      %v2300 = vlaneseq
      %v2301 = vshrl.u32 %v2300, 7
      %v2302 = vsub.s32 %v2299, %v2301
      %v2303 = vrot.slane %v2296, %v2302
      %v2305 = vunpack.c.l.s4 1966171168
      %v2306 = vunpack.c.0.s8 %v2305
      %v2307 = vlaneseq
      %v2308 = vshrl.u32 %v2307, 7
      %v2309 = vsub.s32 %v2306, %v2308
      %v2310 = vrot.slane %v1457, %v2309
      %v2311 = vcombine.low %v2303, %v2310
      %v2313 = vunpack.c.l.s4 1966171168
      %v2314 = vunpack.c.0.s8 %v2313
      %v2315 = vlaneseq
      %v2316 = vshrl.u32 %v2315, 7
      %v2317 = vsub.s32 %v2314, %v2316
      %v2318 = vrot.slane %v2311, %v2317
      %v2319 = vcombine.low %v1440, %v1454
      %v2321 = vunpack.c.l.s4 1966171168
      %v2322 = vunpack.c.0.s8 %v2321
      %v2323 = vlaneseq
      %v2324 = vshrl.u32 %v2323, 7
      %v2325 = vsub.s32 %v2322, %v2324
      %v2326 = vrot.slane %v2319, %v2325
      %v2328 = vunpack.c.l.s4 1966171168
      %v2329 = vunpack.c.0.s8 %v2328
      %v2330 = vlaneseq
      %v2331 = vshrl.u32 %v2330, 7
      %v2332 = vsub.s32 %v2329, %v2331
      %v2333 = vrot.slane %v1456, %v2332
      %v2334 = vcombine.low %v2326, %v2333
      %v2336 = vunpack.c.l.s4 1966171168
      %v2337 = vunpack.c.0.s8 %v2336
      %v2338 = vlaneseq
      %v2339 = vshrl.u32 %v2338, 7
      %v2340 = vsub.s32 %v2337, %v2339
      %v2341 = vrot.slane %v2334, %v2340
      %v2342 = vcombine.low %v1481, %v1495
      %v2344 = vunpack.c.l.s4 1966171168
      %v2345 = vunpack.c.0.s8 %v2344
      %v2346 = vlaneseq
      %v2347 = vshrl.u32 %v2346, 7
      %v2348 = vsub.s32 %v2345, %v2347
      %v2349 = vrot.slane %v2342, %v2348
      %v2351 = vunpack.c.l.s4 1966171168
      %v2352 = vunpack.c.0.s8 %v2351
      %v2353 = vlaneseq
      %v2354 = vshrl.u32 %v2353, 7
      %v2355 = vsub.s32 %v2352, %v2354
      %v2356 = vrot.slane %v1503, %v2355
      %v2357 = vcombine.low %v2349, %v2356
      %v2359 = vunpack.c.l.s4 1966171168
      %v2360 = vunpack.c.0.s8 %v2359
      %v2361 = vlaneseq
      %v2362 = vshrl.u32 %v2361, 7
      %v2363 = vsub.s32 %v2360, %v2362
      %v2364 = vrot.slane %v2357, %v2363
      %v2365 = vcombine.low %v1505, %v1488
      %v2367 = vunpack.c.l.s4 1966171168
      %v2368 = vunpack.c.0.s8 %v2367
      %v2369 = vlaneseq
      %v2370 = vshrl.u32 %v2369, 7
      %v2371 = vsub.s32 %v2368, %v2370
      %v2372 = vrot.slane %v2365, %v2371
      %v2374 = vunpack.c.l.s4 1966171168
      %v2375 = vunpack.c.0.s8 %v2374
      %v2376 = vlaneseq
      %v2377 = vshrl.u32 %v2376, 7
      %v2378 = vsub.s32 %v2375, %v2377
      %v2379 = vrot.slane %v1502, %v2378
      %v2380 = vcombine.low %v2372, %v2379
      %v2382 = vunpack.c.l.s4 1966171168
      %v2383 = vunpack.c.0.s8 %v2382
      %v2384 = vlaneseq
      %v2385 = vshrl.u32 %v2384, 7
      %v2386 = vsub.s32 %v2383, %v2385
      %v2387 = vrot.slane %v2380, %v2386
      %v2388 = vcombine.low %v1504, %v1506
      %v2390 = vunpack.c.l.s4 1966171168
      %v2391 = vunpack.c.0.s8 %v2390
      %v2392 = vlaneseq
      %v2393 = vshrl.u32 %v2392, 7
      %v2394 = vsub.s32 %v2391, %v2393
      %v2395 = vrot.slane %v2388, %v2394
      %v2397 = vunpack.c.l.s4 1966171168
      %v2398 = vunpack.c.0.s8 %v2397
      %v2399 = vlaneseq
      %v2400 = vshrl.u32 %v2399, 7
      %v2401 = vsub.s32 %v2398, %v2400
      %v2402 = vrot.slane %v1530, %v2401
      %v2403 = vcombine.low %v2395, %v2402
      %v2405 = vunpack.c.l.s4 1966171168
      %v2406 = vunpack.c.0.s8 %v2405
      %v2407 = vlaneseq
      %v2408 = vshrl.u32 %v2407, 7
      %v2409 = vsub.s32 %v2406, %v2408
      %v2410 = vrot.slane %v2403, %v2409
      %v2411 = vcombine.low %v1544, %v1552
      %v2413 = vunpack.c.l.s4 1966171168
      %v2414 = vunpack.c.0.s8 %v2413
      %v2415 = vlaneseq
      %v2416 = vshrl.u32 %v2415, 7
      %v2417 = vsub.s32 %v2414, %v2416
      %v2418 = vrot.slane %v2411, %v2417
      %v2420 = vunpack.c.l.s4 1966171168
      %v2421 = vunpack.c.0.s8 %v2420
      %v2422 = vlaneseq
      %v2423 = vshrl.u32 %v2422, 7
      %v2424 = vsub.s32 %v2421, %v2423
      %v2425 = vrot.slane %v1554, %v2424
      %v2426 = vcombine.low %v2418, %v2425
      %v2428 = vunpack.c.l.s4 1966171168
      %v2429 = vunpack.c.0.s8 %v2428
      %v2430 = vlaneseq
      %v2431 = vshrl.u32 %v2430, 7
      %v2432 = vsub.s32 %v2429, %v2431
      %v2433 = vrot.slane %v2426, %v2432
      %v2434 = vcombine.low %v1537, %v1551
      %v2436 = vunpack.c.l.s4 1966171168
      %v2437 = vunpack.c.0.s8 %v2436
      %v2438 = vlaneseq
      %v2439 = vshrl.u32 %v2438, 7
      %v2440 = vsub.s32 %v2437, %v2439
      %v2441 = vrot.slane %v2434, %v2440
      %v2443 = vunpack.c.l.s4 1966171168
      %v2444 = vunpack.c.0.s8 %v2443
      %v2445 = vlaneseq
      %v2446 = vshrl.u32 %v2445, 7
      %v2447 = vsub.s32 %v2444, %v2446
      %v2448 = vrot.slane %v1553, %v2447
      %v2449 = vcombine.low %v2441, %v2448
      %v2451 = vunpack.c.l.s4 1966171168
      %v2452 = vunpack.c.0.s8 %v2451
      %v2453 = vlaneseq
      %v2454 = vshrl.u32 %v2453, 7
      %v2455 = vsub.s32 %v2452, %v2454
      %v2456 = vrot.slane %v2449, %v2455
      %v2457 = vcombine.low %v1578, %v1592
      %v2459 = vunpack.c.l.s4 1966171168
      %v2460 = vunpack.c.0.s8 %v2459
      %v2461 = vlaneseq
      %v2462 = vshrl.u32 %v2461, 7
      %v2463 = vsub.s32 %v2460, %v2462
      %v2464 = vrot.slane %v2457, %v2463
      %v2466 = vunpack.c.l.s4 1966171168
      %v2467 = vunpack.c.0.s8 %v2466
      %v2468 = vlaneseq
      %v2469 = vshrl.u32 %v2468, 7
      %v2470 = vsub.s32 %v2467, %v2469
      %v2471 = vrot.slane %v1600, %v2470
      %v2472 = vcombine.low %v2464, %v2471
      %v2474 = vunpack.c.l.s4 1966171168
      %v2475 = vunpack.c.0.s8 %v2474
      %v2476 = vlaneseq
      %v2477 = vshrl.u32 %v2476, 7
      %v2478 = vsub.s32 %v2475, %v2477
      %v2479 = vrot.slane %v2472, %v2478
      %v2480 = vcombine.low %v1602, %v1585
      %v2482 = vunpack.c.l.s4 1966171168
      %v2483 = vunpack.c.0.s8 %v2482
      %v2484 = vlaneseq
      %v2485 = vshrl.u32 %v2484, 7
      %v2486 = vsub.s32 %v2483, %v2485
      %v2487 = vrot.slane %v2480, %v2486
      %v2489 = vunpack.c.l.s4 1966171168
      %v2490 = vunpack.c.0.s8 %v2489
      %v2491 = vlaneseq
      %v2492 = vshrl.u32 %v2491, 7
      %v2493 = vsub.s32 %v2490, %v2492
      %v2494 = vrot.slane %v1599, %v2493
      %v2495 = vcombine.low %v2487, %v2494
      %v2497 = vunpack.c.l.s4 1966171168
      %v2498 = vunpack.c.0.s8 %v2497
      %v2499 = vlaneseq
      %v2500 = vshrl.u32 %v2499, 7
      %v2501 = vsub.s32 %v2498, %v2500
      %v2502 = vrot.slane %v2495, %v2501
      %v2503 = vcombine.low %v1601, %v1603
      %v2505 = vunpack.c.l.s4 1966171168
      %v2506 = vunpack.c.0.s8 %v2505
      %v2507 = vlaneseq
      %v2508 = vshrl.u32 %v2507, 7
      %v2509 = vsub.s32 %v2506, %v2508
      %v2510 = vrot.slane %v2503, %v2509
      %v2512 = vunpack.c.l.s4 1966171168
      %v2513 = vunpack.c.0.s8 %v2512
      %v2514 = vlaneseq
      %v2515 = vshrl.u32 %v2514, 7
      %v2516 = vsub.s32 %v2513, %v2515
      %v2517 = vrot.slane %v1627, %v2516
      %v2518 = vcombine.low %v2510, %v2517
      %v2520 = vunpack.c.l.s4 1966171168
      %v2521 = vunpack.c.0.s8 %v2520
      %v2522 = vlaneseq
      %v2523 = vshrl.u32 %v2522, 7
      %v2524 = vsub.s32 %v2521, %v2523
      %v2525 = vrot.slane %v2518, %v2524
      %v2526 = vcombine.low %v1641, %v1649
      %v2528 = vunpack.c.l.s4 1966171168
      %v2529 = vunpack.c.0.s8 %v2528
      %v2530 = vlaneseq
      %v2531 = vshrl.u32 %v2530, 7
      %v2532 = vsub.s32 %v2529, %v2531
      %v2533 = vrot.slane %v2526, %v2532
      %v2535 = vunpack.c.l.s4 1966171168
      %v2536 = vunpack.c.0.s8 %v2535
      %v2537 = vlaneseq
      %v2538 = vshrl.u32 %v2537, 7
      %v2539 = vsub.s32 %v2536, %v2538
      %v2540 = vrot.slane %v1651, %v2539
      %v2541 = vcombine.low %v2533, %v2540
      %v2543 = vunpack.c.l.s4 1966171168
      %v2544 = vunpack.c.0.s8 %v2543
      %v2545 = vlaneseq
      %v2546 = vshrl.u32 %v2545, 7
      %v2547 = vsub.s32 %v2544, %v2546
      %v2548 = vrot.slane %v2541, %v2547
      %v2549 = vcombine.low %v1634, %v1648
      %v2551 = vunpack.c.l.s4 1966171168
      %v2552 = vunpack.c.0.s8 %v2551
      %v2553 = vlaneseq
      %v2554 = vshrl.u32 %v2553, 7
      %v2555 = vsub.s32 %v2552, %v2554
      %v2556 = vrot.slane %v2549, %v2555
      %v2558 = vunpack.c.l.s4 1966171168
      %v2559 = vunpack.c.0.s8 %v2558
      %v2560 = vlaneseq
      %v2561 = vshrl.u32 %v2560, 7
      %v2562 = vsub.s32 %v2559, %v2561
      %v2563 = vrot.slane %v1650, %v2562
      %v2564 = vcombine.low %v2556, %v2563
      %v2566 = vunpack.c.l.s4 1966171168
      %v2567 = vunpack.c.0.s8 %v2566
      %v2568 = vlaneseq
      %v2569 = vshrl.u32 %v2568, 7
      %v2570 = vsub.s32 %v2567, %v2569
      %v2571 = vrot.slane %v2564, %v2570
      %vm2612 = vcmask 256000
      %v2613 = vsel %vm2612, %v1674, -inf
      %v2614 = vrot.slane %v2613, 4
      %v2615 = vmax.f32 %v2613, %v2614
      %v2616 = vrot.slane %v2615, 2
      %v2617 = vmax.f32 %v2615, %v2616
      %v2618 = vrot.slane %v2617, 1
      %v2619 = vmax.f32 %v2617, %v2618
      %v2620 = vsel %vm2612, %v1697, -inf
      %v2621 = vrot.slane %v2620, 4
      %v2622 = vmax.f32 %v2620, %v2621
      %v2623 = vrot.slane %v2622, 2
      %v2624 = vmax.f32 %v2622, %v2623
      %v2625 = vrot.slane %v2624, 1
      %v2626 = vmax.f32 %v2624, %v2625
      %v2627 = vsel %vm2612, %v1720, -inf
      %v2628 = vrot.slane %v2627, 4
      %v2629 = vmax.f32 %v2627, %v2628
      %v2630 = vrot.slane %v2629, 2
      %v2631 = vmax.f32 %v2629, %v2630
      %v2632 = vrot.slane %v2631, 1
      %v2633 = vmax.f32 %v2631, %v2632
      %v2634 = vsel %vm2612, %v1743, -inf
      %v2635 = vrot.slane %v2634, 4
      %v2636 = vmax.f32 %v2634, %v2635
      %v2637 = vrot.slane %v2636, 2
      %v2638 = vmax.f32 %v2636, %v2637
      %v2639 = vrot.slane %v2638, 1
      %v2640 = vmax.f32 %v2638, %v2639
      %v2641 = vsel %vm2612, %v1766, -inf
      %v2642 = vrot.slane %v2641, 4
      %v2643 = vmax.f32 %v2641, %v2642
      %v2644 = vrot.slane %v2643, 2
      %v2645 = vmax.f32 %v2643, %v2644
      %v2646 = vrot.slane %v2645, 1
      %v2647 = vmax.f32 %v2645, %v2646
      %v2648 = vsel %vm2612, %v1789, -inf
      %v2649 = vrot.slane %v2648, 4
      %v2650 = vmax.f32 %v2648, %v2649
      %v2651 = vrot.slane %v2650, 2
      %v2652 = vmax.f32 %v2650, %v2651
      %v2653 = vrot.slane %v2652, 1
      %v2654 = vmax.f32 %v2652, %v2653
      %v2655 = vsel %vm2612, %v1812, -inf
      %v2656 = vrot.slane %v2655, 4
      %v2657 = vmax.f32 %v2655, %v2656
      %v2658 = vrot.slane %v2657, 2
      %v2659 = vmax.f32 %v2657, %v2658
      %v2660 = vrot.slane %v2659, 1
      %v2661 = vmax.f32 %v2659, %v2660
      %v2662 = vsel %vm2612, %v1835, -inf
      %v2663 = vrot.slane %v2662, 4
      %v2664 = vmax.f32 %v2662, %v2663
      %v2665 = vrot.slane %v2664, 2
      %v2666 = vmax.f32 %v2664, %v2665
      %v2667 = vrot.slane %v2666, 1
      %v2668 = vmax.f32 %v2666, %v2667
      %v2669 = vsel %vm2612, %v1858, -inf
      %v2670 = vrot.slane %v2669, 4
      %v2671 = vmax.f32 %v2669, %v2670
      %v2672 = vrot.slane %v2671, 2
      %v2673 = vmax.f32 %v2671, %v2672
      %v2674 = vrot.slane %v2673, 1
      %v2675 = vmax.f32 %v2673, %v2674
      %v2676 = vsel %vm2612, %v1881, -inf
      %v2677 = vrot.slane %v2676, 4
      %v2678 = vmax.f32 %v2676, %v2677
      %v2679 = vrot.slane %v2678, 2
      %v2680 = vmax.f32 %v2678, %v2679
      %v2681 = vrot.slane %v2680, 1
      %v2682 = vmax.f32 %v2680, %v2681
      %v2683 = vsel %vm2612, %v1904, -inf
      %v2684 = vrot.slane %v2683, 4
      %v2685 = vmax.f32 %v2683, %v2684
      %v2686 = vrot.slane %v2685, 2
      %v2687 = vmax.f32 %v2685, %v2686
      %v2688 = vrot.slane %v2687, 1
      %v2689 = vmax.f32 %v2687, %v2688
      %v2690 = vsel %vm2612, %v1927, -inf
      %v2691 = vrot.slane %v2690, 4
      %v2692 = vmax.f32 %v2690, %v2691
      %v2693 = vrot.slane %v2692, 2
      %v2694 = vmax.f32 %v2692, %v2693
      %v2695 = vrot.slane %v2694, 1
      %v2696 = vmax.f32 %v2694, %v2695
      %v2697 = vsel %vm2612, %v1950, -inf
      %v2698 = vrot.slane %v2697, 4
      %v2699 = vmax.f32 %v2697, %v2698
      %v2700 = vrot.slane %v2699, 2
      %v2701 = vmax.f32 %v2699, %v2700
      %v2702 = vrot.slane %v2701, 1
      %v2703 = vmax.f32 %v2701, %v2702
      %v2704 = vsel %vm2612, %v1973, -inf
      %v2705 = vrot.slane %v2704, 4
      %v2706 = vmax.f32 %v2704, %v2705
      %v2707 = vrot.slane %v2706, 2
      %v2708 = vmax.f32 %v2706, %v2707
      %v2709 = vrot.slane %v2708, 1
      %v2710 = vmax.f32 %v2708, %v2709
      %v2711 = vsel %vm2612, %v1996, -inf
      %v2712 = vrot.slane %v2711, 4
      %v2713 = vmax.f32 %v2711, %v2712
      %v2714 = vrot.slane %v2713, 2
      %v2715 = vmax.f32 %v2713, %v2714
      %v2716 = vrot.slane %v2715, 1
      %v2717 = vmax.f32 %v2715, %v2716
      %v2718 = vsel %vm2612, %v2019, -inf
      %v2719 = vrot.slane %v2718, 4
      %v2720 = vmax.f32 %v2718, %v2719
      %v2721 = vrot.slane %v2720, 2
      %v2722 = vmax.f32 %v2720, %v2721
      %v2723 = vrot.slane %v2722, 1
      %v2724 = vmax.f32 %v2722, %v2723
      %v2725 = vsel %vm2612, %v2042, -inf
      %v2726 = vrot.slane %v2725, 4
      %v2727 = vmax.f32 %v2725, %v2726
      %v2728 = vrot.slane %v2727, 2
      %v2729 = vmax.f32 %v2727, %v2728
      %v2730 = vrot.slane %v2729, 1
      %v2731 = vmax.f32 %v2729, %v2730
      %v2732 = vsel %vm2612, %v2065, -inf
      %v2733 = vrot.slane %v2732, 4
      %v2734 = vmax.f32 %v2732, %v2733
      %v2735 = vrot.slane %v2734, 2
      %v2736 = vmax.f32 %v2734, %v2735
      %v2737 = vrot.slane %v2736, 1
      %v2738 = vmax.f32 %v2736, %v2737
      %v2739 = vsel %vm2612, %v2088, -inf
      %v2740 = vrot.slane %v2739, 4
      %v2741 = vmax.f32 %v2739, %v2740
      %v2742 = vrot.slane %v2741, 2
      %v2743 = vmax.f32 %v2741, %v2742
      %v2744 = vrot.slane %v2743, 1
      %v2745 = vmax.f32 %v2743, %v2744
      %v2746 = vsel %vm2612, %v2111, -inf
      %v2747 = vrot.slane %v2746, 4
      %v2748 = vmax.f32 %v2746, %v2747
      %v2749 = vrot.slane %v2748, 2
      %v2750 = vmax.f32 %v2748, %v2749
      %v2751 = vrot.slane %v2750, 1
      %v2752 = vmax.f32 %v2750, %v2751
      %v2753 = vsel %vm2612, %v2134, -inf
      %v2754 = vrot.slane %v2753, 4
      %v2755 = vmax.f32 %v2753, %v2754
      %v2756 = vrot.slane %v2755, 2
      %v2757 = vmax.f32 %v2755, %v2756
      %v2758 = vrot.slane %v2757, 1
      %v2759 = vmax.f32 %v2757, %v2758
      %v2760 = vsel %vm2612, %v2157, -inf
      %v2761 = vrot.slane %v2760, 4
      %v2762 = vmax.f32 %v2760, %v2761
      %v2763 = vrot.slane %v2762, 2
      %v2764 = vmax.f32 %v2762, %v2763
      %v2765 = vrot.slane %v2764, 1
      %v2766 = vmax.f32 %v2764, %v2765
      %v2767 = vsel %vm2612, %v2180, -inf
      %v2768 = vrot.slane %v2767, 4
      %v2769 = vmax.f32 %v2767, %v2768
      %v2770 = vrot.slane %v2769, 2
      %v2771 = vmax.f32 %v2769, %v2770
      %v2772 = vrot.slane %v2771, 1
      %v2773 = vmax.f32 %v2771, %v2772
      %v2774 = vsel %vm2612, %v2203, -inf
      %v2775 = vrot.slane %v2774, 4
      %v2776 = vmax.f32 %v2774, %v2775
      %v2777 = vrot.slane %v2776, 2
      %v2778 = vmax.f32 %v2776, %v2777
      %v2779 = vrot.slane %v2778, 1
      %v2780 = vmax.f32 %v2778, %v2779
      %v2781 = vsel %vm2612, %v2226, -inf
      %v2782 = vrot.slane %v2781, 4
      %v2783 = vmax.f32 %v2781, %v2782
      %v2784 = vrot.slane %v2783, 2
      %v2785 = vmax.f32 %v2783, %v2784
      %v2786 = vrot.slane %v2785, 1
      %v2787 = vmax.f32 %v2785, %v2786
      %v2788 = vsel %vm2612, %v2249, -inf
      %v2789 = vrot.slane %v2788, 4
      %v2790 = vmax.f32 %v2788, %v2789
      %v2791 = vrot.slane %v2790, 2
      %v2792 = vmax.f32 %v2790, %v2791
      %v2793 = vrot.slane %v2792, 1
      %v2794 = vmax.f32 %v2792, %v2793
      %v2795 = vsel %vm2612, %v2272, -inf
      %v2796 = vrot.slane %v2795, 4
      %v2797 = vmax.f32 %v2795, %v2796
      %v2798 = vrot.slane %v2797, 2
      %v2799 = vmax.f32 %v2797, %v2798
      %v2800 = vrot.slane %v2799, 1
      %v2801 = vmax.f32 %v2799, %v2800
      %v2802 = vsel %vm2612, %v2295, -inf
      %v2803 = vrot.slane %v2802, 4
      %v2804 = vmax.f32 %v2802, %v2803
      %v2805 = vrot.slane %v2804, 2
      %v2806 = vmax.f32 %v2804, %v2805
      %v2807 = vrot.slane %v2806, 1
      %v2808 = vmax.f32 %v2806, %v2807
      %v2809 = vsel %vm2612, %v2318, -inf
      %v2810 = vrot.slane %v2809, 4
      %v2811 = vmax.f32 %v2809, %v2810
      %v2812 = vrot.slane %v2811, 2
      %v2813 = vmax.f32 %v2811, %v2812
      %v2814 = vrot.slane %v2813, 1
      %v2815 = vmax.f32 %v2813, %v2814
      %v2816 = vsel %vm2612, %v2341, -inf
      %v2817 = vrot.slane %v2816, 4
      %v2818 = vmax.f32 %v2816, %v2817
      %v2819 = vrot.slane %v2818, 2
      %v2820 = vmax.f32 %v2818, %v2819
      %v2821 = vrot.slane %v2820, 1
      %v2822 = vmax.f32 %v2820, %v2821
      %v2823 = vsel %vm2612, %v2364, -inf
      %v2824 = vrot.slane %v2823, 4
      %v2825 = vmax.f32 %v2823, %v2824
      %v2826 = vrot.slane %v2825, 2
      %v2827 = vmax.f32 %v2825, %v2826
      %v2828 = vrot.slane %v2827, 1
      %v2829 = vmax.f32 %v2827, %v2828
      %v2830 = vsel %vm2612, %v2387, -inf
      %v2831 = vrot.slane %v2830, 4
      %v2832 = vmax.f32 %v2830, %v2831
      %v2833 = vrot.slane %v2832, 2
      %v2834 = vmax.f32 %v2832, %v2833
      %v2835 = vrot.slane %v2834, 1
      %v2836 = vmax.f32 %v2834, %v2835
      %v2837 = vsel %vm2612, %v2410, -inf
      %v2838 = vrot.slane %v2837, 4
      %v2839 = vmax.f32 %v2837, %v2838
      %v2840 = vrot.slane %v2839, 2
      %v2841 = vmax.f32 %v2839, %v2840
      %v2842 = vrot.slane %v2841, 1
      %v2843 = vmax.f32 %v2841, %v2842
      %v2844 = vsel %vm2612, %v2433, -inf
      %v2845 = vrot.slane %v2844, 4
      %v2846 = vmax.f32 %v2844, %v2845
      %v2847 = vrot.slane %v2846, 2
      %v2848 = vmax.f32 %v2846, %v2847
      %v2849 = vrot.slane %v2848, 1
      %v2850 = vmax.f32 %v2848, %v2849
      %v2851 = vsel %vm2612, %v2456, -inf
      %v2852 = vrot.slane %v2851, 4
      %v2853 = vmax.f32 %v2851, %v2852
      %v2854 = vrot.slane %v2853, 2
      %v2855 = vmax.f32 %v2853, %v2854
      %v2856 = vrot.slane %v2855, 1
      %v2857 = vmax.f32 %v2855, %v2856
      %v2858 = vsel %vm2612, %v2479, -inf
      %v2859 = vrot.slane %v2858, 4
      %v2860 = vmax.f32 %v2858, %v2859
      %v2861 = vrot.slane %v2860, 2
      %v2862 = vmax.f32 %v2860, %v2861
      %v2863 = vrot.slane %v2862, 1
      %v2864 = vmax.f32 %v2862, %v2863
      %v2865 = vsel %vm2612, %v2502, -inf
      %v2866 = vrot.slane %v2865, 4
      %v2867 = vmax.f32 %v2865, %v2866
      %v2868 = vrot.slane %v2867, 2
      %v2869 = vmax.f32 %v2867, %v2868
      %v2870 = vrot.slane %v2869, 1
      %v2871 = vmax.f32 %v2869, %v2870
      %v2872 = vsel %vm2612, %v2525, -inf
      %v2873 = vrot.slane %v2872, 4
      %v2874 = vmax.f32 %v2872, %v2873
      %v2875 = vrot.slane %v2874, 2
      %v2876 = vmax.f32 %v2874, %v2875
      %v2877 = vrot.slane %v2876, 1
      %v2878 = vmax.f32 %v2876, %v2877
      %v2879 = vsel %vm2612, %v2548, -inf
      %v2880 = vrot.slane %v2879, 4
      %v2881 = vmax.f32 %v2879, %v2880
      %v2882 = vrot.slane %v2881, 2
      %v2883 = vmax.f32 %v2881, %v2882
      %v2884 = vrot.slane %v2883, 1
      %v2885 = vmax.f32 %v2883, %v2884
      %v2886 = vsel %vm2612, %v2571, -inf
      %v2887 = vrot.slane %v2886, 4
      %v2888 = vmax.f32 %v2886, %v2887
      %v2889 = vrot.slane %v2888, 2
      %v2890 = vmax.f32 %v2888, %v2889
      %v2891 = vrot.slane %v2890, 1
      %v2892 = vmax.f32 %v2890, %v2891
      %vm2933 = vcmask 1041409
      %v2934 = vsel %vm2933, %v2626, %v2619
      %vm2935 = vcmask 1042434
      %v2936 = vsel %vm2935, %v2633, %v2934
      %vm2937 = vcmask 1043459
      %v2938 = vsel %vm2937, %v2640, %v2936
      %vm2939 = vcmask 1044484
      %v2940 = vsel %vm2939, %v2647, %v2938
      %v2941 = vsel %vm2933, %v2661, %v2654
      %v2942 = vsel %vm2935, %v2668, %v2941
      %v2943 = vsel %vm2937, %v2675, %v2942
      %v2944 = vsel %vm2939, %v2682, %v2943
      %v2945 = vsel %vm2933, %v2696, %v2689
      %v2946 = vsel %vm2935, %v2703, %v2945
      %v2947 = vsel %vm2937, %v2710, %v2946
      %v2948 = vsel %vm2939, %v2717, %v2947
      %v2949 = vsel %vm2933, %v2731, %v2724
      %v2950 = vsel %vm2935, %v2738, %v2949
      %v2951 = vsel %vm2937, %v2745, %v2950
      %v2952 = vsel %vm2939, %v2752, %v2951
      %v2953 = vsel %vm2933, %v2766, %v2759
      %v2954 = vsel %vm2935, %v2773, %v2953
      %v2955 = vsel %vm2937, %v2780, %v2954
      %v2956 = vsel %vm2939, %v2787, %v2955
      %v2957 = vsel %vm2933, %v2801, %v2794
      %v2958 = vsel %vm2935, %v2808, %v2957
      %v2959 = vsel %vm2937, %v2815, %v2958
      %v2960 = vsel %vm2939, %v2822, %v2959
      %v2961 = vsel %vm2933, %v2836, %v2829
      %v2962 = vsel %vm2935, %v2843, %v2961
      %v2963 = vsel %vm2937, %v2850, %v2962
      %v2964 = vsel %vm2939, %v2857, %v2963
      %v2965 = vsel %vm2933, %v2871, %v2864
      %v2966 = vsel %vm2935, %v2878, %v2965
      %v2967 = vsel %vm2937, %v2885, %v2966
      %v2968 = vsel %vm2939, %v2892, %v2967
      %v2977 = vcombine.low %v2940, %v2948
      %v2978 = vcombine.high %v2940, %v2948
      %v2980 = vunpack.c.l.s4 1983009808
      %v2981 = vunpack.c.0.s8 %v2980
      %v2982 = vlaneseq
      %v2983 = vshrl.u32 %v2982, 7
      %v2984 = vsub.s32 %v2981, %v2983
      %v2985 = vrot.slane %v2977, %v2984
      %v2987 = vunpack.c.l.s4 1983009808
      %v2988 = vunpack.c.0.s8 %v2987
      %v2989 = vlaneseq
      %v2990 = vshrl.u32 %v2989, 7
      %v2991 = vsub.s32 %v2988, %v2990
      %v2992 = vrot.slane %v2978, %v2991
      %v2993 = vcombine.low %v2944, %v2952
      %v2994 = vcombine.high %v2944, %v2952
      %v2996 = vunpack.c.l.s4 1983009808
      %v2997 = vunpack.c.0.s8 %v2996
      %v2998 = vlaneseq
      %v2999 = vshrl.u32 %v2998, 7
      %v3000 = vsub.s32 %v2997, %v2999
      %v3001 = vrot.slane %v2993, %v3000
      %v3003 = vunpack.c.l.s4 1983009808
      %v3004 = vunpack.c.0.s8 %v3003
      %v3005 = vlaneseq
      %v3006 = vshrl.u32 %v3005, 7
      %v3007 = vsub.s32 %v3004, %v3006
      %v3008 = vrot.slane %v2994, %v3007
      %v3009 = vcombine.low %v2956, %v2964
      %v3010 = vcombine.high %v2956, %v2964
      %v3012 = vunpack.c.l.s4 1983009808
      %v3013 = vunpack.c.0.s8 %v3012
      %v3014 = vlaneseq
      %v3015 = vshrl.u32 %v3014, 7
      %v3016 = vsub.s32 %v3013, %v3015
      %v3017 = vrot.slane %v3009, %v3016
      %v3019 = vunpack.c.l.s4 1983009808
      %v3020 = vunpack.c.0.s8 %v3019
      %v3021 = vlaneseq
      %v3022 = vshrl.u32 %v3021, 7
      %v3023 = vsub.s32 %v3020, %v3022
      %v3024 = vrot.slane %v3010, %v3023
      %v3025 = vcombine.low %v2960, %v2968
      %v3026 = vcombine.high %v2960, %v2968
      %v3028 = vunpack.c.l.s4 1983009808
      %v3029 = vunpack.c.0.s8 %v3028
      %v3030 = vlaneseq
      %v3031 = vshrl.u32 %v3030, 7
      %v3032 = vsub.s32 %v3029, %v3031
      %v3033 = vrot.slane %v3025, %v3032
      %v3035 = vunpack.c.l.s4 1983009808
      %v3036 = vunpack.c.0.s8 %v3035
      %v3037 = vlaneseq
      %v3038 = vshrl.u32 %v3037, 7
      %v3039 = vsub.s32 %v3036, %v3038
      %v3040 = vrot.slane %v3026, %v3039
      %v3041 = vcombine.low %v2985, %v3001
      %v3042 = vcombine.high %v2985, %v3001
      %v3044 = vunpack.c.l.s4 1934713408
      %v3045 = vunpack.c.0.s8 %v3044
      %v3046 = vlaneseq
      %v3047 = vshrl.u32 %v3046, 7
      %v3048 = vsub.s32 %v3045, %v3047
      %v3049 = vrot.slane %v3041, %v3048
      %v3051 = vunpack.c.l.s4 1934713408
      %v3052 = vunpack.c.0.s8 %v3051
      %v3053 = vlaneseq
      %v3054 = vshrl.u32 %v3053, 7
      %v3055 = vsub.s32 %v3052, %v3054
      %v3056 = vrot.slane %v3042, %v3055
      %v3057 = vcombine.low %v2992, %v3008
      %v3059 = vunpack.c.l.s4 1934713408
      %v3060 = vunpack.c.0.s8 %v3059
      %v3061 = vlaneseq
      %v3062 = vshrl.u32 %v3061, 7
      %v3063 = vsub.s32 %v3060, %v3062
      %v3064 = vrot.slane %v3057, %v3063
      %v3065 = vcombine.low %v3017, %v3033
      %v3066 = vcombine.high %v3017, %v3033
      %v3068 = vunpack.c.l.s4 1934713408
      %v3069 = vunpack.c.0.s8 %v3068
      %v3070 = vlaneseq
      %v3071 = vshrl.u32 %v3070, 7
      %v3072 = vsub.s32 %v3069, %v3071
      %v3073 = vrot.slane %v3065, %v3072
      %v3075 = vunpack.c.l.s4 1934713408
      %v3076 = vunpack.c.0.s8 %v3075
      %v3077 = vlaneseq
      %v3078 = vshrl.u32 %v3077, 7
      %v3079 = vsub.s32 %v3076, %v3078
      %v3080 = vrot.slane %v3066, %v3079
      %v3081 = vcombine.low %v3024, %v3040
      %v3083 = vunpack.c.l.s4 1934713408
      %v3084 = vunpack.c.0.s8 %v3083
      %v3085 = vlaneseq
      %v3086 = vshrl.u32 %v3085, 7
      %v3087 = vsub.s32 %v3084, %v3086
      %v3088 = vrot.slane %v3081, %v3087
      %v3089 = vcombine.low %v3049, %v3073
      %v3090 = vcombine.high %v3049, %v3073
      %v3091 = vcombine.low %v3056, %v3080
      %v3092 = vcombine.high %v3056, %v3080
      %v3093 = vcombine.low %v3064, %v3088
      %3095 = vrot.lane.b32.xlu0 %v3090, 32
      %v3096 = vpop.permute.xlu0 %3095
      %3099 = vrot.lane.b32.xlu0 %v3091, 64
      %v3100 = vpop.permute.xlu0 %3099
      %3103 = vrot.lane.b32.xlu0 %v3092, 96
      %v3104 = vpop.permute.xlu0 %3103
      %v3106 = vsel %vm618, %v3089, %v3096
      %v3107 = vsel %vm650, %v3106, %v3100
      %vm3108 = vcmask 785408
      %v3109 = vsel %vm3108, %v3107, %v3104
      %v3110 = vld [vmem:[%s5] sm:$0xff]
      %v3111 = vld [vmem:[%s5 + $0x8] sm:$0xff]
      %v3112 = vld [vmem:[%s5 + $0x10] sm:$0xff]
      %v3113 = vld [vmem:[%s5 + $0x18] sm:$0xff]
      %v3114 = vld [vmem:[%s5 + $0x20] sm:$0xff]
      %v3115 = vld [vmem:[%s5 + $0x28] sm:$0xff]
      %v3116 = vld [vmem:[%s5 + $0x30] sm:$0xff]
      %v3117 = vld [vmem:[%s5 + $0x38] sm:$0xff]
      %v3118 = vld [vmem:[%s5 + $0x40] sm:$0xff]
      %v3119 = vld [vmem:[%s5 + $0x48] sm:$0xff]
      %v3120 = vld [vmem:[%s5 + $0x50] sm:$0xff]
      %v3121 = vld [vmem:[%s5 + $0x58] sm:$0xff]
      %v3122 = vld [vmem:[%s5 + $0x60] sm:$0xff]
      %v3123 = vld [vmem:[%s5 + $0x68] sm:$0xff]
      %v3124 = vld [vmem:[%s5 + $0x70] sm:$0xff]
      %v3125 = vld [vmem:[%s5 + $0x78] sm:$0xff]
      %v3126 = vld [vmem:[%s5 + $0x80] sm:$0xff]
      %v3127 = vld [vmem:[%s5 + $0x88] sm:$0xff]
      %v3128 = vld [vmem:[%s5 + $0x90] sm:$0xff]
      %v3129 = vld [vmem:[%s5 + $0x98] sm:$0xff]
      %v3130 = vld [vmem:[%s6] sm:$0x1]
      %v3132 = vlaneseq
      %v3133 = vshrl.u32 %v3132, 7
      %v3134 = vsub.s32 0, %v3133
      %v3135 = vrot.slane %v3130, %v3134
      %v3138 = vsel %vm618, %v3093, 0
      %3140 = vmatprep.subr.mxu0 0.0
      %3141 = vmatpush1.msra.mxu0 %v3125
      %3142 = vmatprep.subr.mxu0 0.0
      %3143 = vmatpush1.msra.mxu0 %v3124
      %3144 = vmatprep.subr.mxu0 0.0
      %3145 = vmatpush1.msra.mxu0 %v3123
      %3146 = vmatprep.subr.mxu0 0.0
      %3147 = vmatpush1.msra.mxu0 %v3122
      %3148 = vmatprep.subr.mxu0 0.0
      %3149 = vmatpush1.msra.mxu0 %v3121
      %3150 = vmatprep.subr.mxu0 0.0
      %3151 = vmatpush1.msra.mxu0 %v3120
      %3152 = vmatprep.subr.mxu0 0.0
      %3153 = vmatpush1.msra.mxu0 %v3119
      %3154 = vmatprep.subr.mxu0 0.0
      %3155 = vmatpush1.msra.mxu0 %v3118
      %3156 = vmatprep.subr.mxu0 0.0
      %3157 = vmatpush1.msra.mxu0 %v3117
      %3158 = vmatprep.subr.mxu0 0.0
      %3159 = vmatpush1.msra.mxu0 %v3116
      %3160 = vmatprep.subr.mxu0 0.0
      %3161 = vmatpush1.msra.mxu0 %v3115
      %3162 = vmatprep.subr.mxu0 0.0
      %3163 = vmatpush1.msra.mxu0 %v3114
      %3164 = vmatprep.subr.mxu0 0.0
      %3165 = vmatpush1.msra.mxu0 %v3113
      %3166 = vmatprep.subr.mxu0 0.0
      %3167 = vmatpush1.msra.mxu0 %v3112
      %3168 = vmatprep.subr.mxu0 0.0
      %3169 = vmatpush1.msra.mxu0 %v3111
      %3170 = vmatprep.subr.mxu0 0.0
      %3171 = vmatpush1.msra.mxu0 %v3110
      %3172 = vmatprep.subr.mxu0 0.0
      %3173 = vmatpush2.msra.mxu0 0.0
      %3174 = vmatprep.subr.mxu0 0.0
      %3175 = vmatpush2.msra.mxu0 0.0
      %3176 = vmatprep.subr.mxu0 0.0
      %3177 = vmatpush2.msra.mxu0 0.0
      %3178 = vmatprep.subr.mxu0 0.0
      %3179 = vmatpush2.msra.mxu0 0.0
      %3180 = vmatprep.subr.mxu0 0.0
      %3181 = vmatpush2.msra.mxu0 0.0
      %3182 = vmatprep.subr.mxu0 0.0
      %3183 = vmatpush2.msra.mxu0 0.0
      %3184 = vmatprep.subr.mxu0 0.0
      %3185 = vmatpush2.msra.mxu0 0.0
      %3186 = vmatprep.subr.mxu0 0.0
      %3187 = vmatpush2.msra.mxu0 0.0
      %3188 = vmatprep.subr.mxu0 0.0
      %3189 = vmatpush2.msra.mxu0 0.0
      %3190 = vmatprep.subr.mxu0 0.0
      %3191 = vmatpush2.msra.mxu0 0.0
      %3192 = vmatprep.subr.mxu0 0.0
      %3193 = vmatpush2.msra.mxu0 0.0
      %3194 = vmatprep.subr.mxu0 0.0
      %3195 = vmatpush2.msra.mxu0 0.0
      %3196 = vmatprep.subr.mxu0 0.0
      %3197 = vmatpush2.msra.mxu0 %v3129
      %3198 = vmatprep.subr.mxu0 0.0
      %3199 = vmatpush2.msra.mxu0 %v3128
      %3200 = vmatprep.subr.mxu0 0.0
      %3201 = vmatpush2.msra.mxu0 %v3127
      %3202 = vmatprep.subr.mxu0 0.0
      %3203 = vmatpush2.msra.mxu0 %v3126
      %3204 = vmatprep.mubr.f32.mxu0 %v3138
      %3205 = vmatmul.mubr.f32.gmra.mxu0 %v3109
      %v3206 = vpop.f32.mrf.mxu0
      %v3207 = vadd.f32 %v3135, %v3206
      %v3208 = vpop.f32.mrf.mxu0
      %3209 = vdwg.mxu0
      %vm3210 = vcmask 23552
      %3211 = vst.msk [vmem:[%s278] sm:$0xff] %vm3210, %v3207
      %p3212 = scmp.lt.s32.totalorder %s18, 1
      %s3213 = scalar_select %p3212, %s18, 1
      %s3214 = smul.addr %s3213, 8
      %s3215 = scalar_lea.vmem %s7, %s3214
      // Predicated region
      $region49: #{tpu_custom_call.1} parent=47 // pred_check
        %p3216 = pneg %p188
      $region50: #{tpu_custom_call.1} parent=47 // pred_check_branch
        %3218 = sbr.rel (%p3216) target = $region52
      $region51: #{tpu_custom_call.1} parent=47 // pred_region
        _
      $region52: #{tpu_custom_call.1} parent=47 // pred_fallthru
        _
    $region48: #{tpu_custom_call.1} parent=5 // pred_fallthru
      _
    %p3219 = scmp.le.s32.totalorder 2, %s13
    // Predicated region
    $region53: #{tpu_custom_call.1} parent=5 // pred_check
      %p3220 = pneg %p3219
    $region54: #{tpu_custom_call.1} parent=5 // pred_check_branch
      %3222 = sbr.rel (%p3220) target = $region56
    $region55: #{tpu_custom_call.1} parent=5 // pred_region
      %s3223 = ssub.s32 %s13, 2
      // Predicated region
      $region57: #{tpu_custom_call.1} parent=55 // pred_check
        %p3224 = pneg %p194
      $region58: #{tpu_custom_call.1} parent=55 // pred_check_branch
        %3226 = sbr.rel (%p3224) target = $region60
      $region59: #{tpu_custom_call.1} parent=55 // pred_region
        %p3227 = scmp.lt.s32.totalorder %s19, 1
        %s3228 = scalar_select %p3227, %s19, 1
        %s3229 = smul.addr %s3228, 8
        %s3230 = scalar_lea.vmem %s7, %s3229
      $region60: #{tpu_custom_call.1} parent=55 // pred_fallthru
        _
    $region56: #{tpu_custom_call.1} parent=5 // pred_fallthru
      _
  $region6: #{tpu_custom_call.1} parent=0 // loop_footer
    %s17 = sadd.s32 1, %s13
  $region7: #{tpu_custom_call.1} parent=0 // loop_footer_branch
    %12 = sbr.rel target = $region3
  $region8: #{tpu_custom_call.1} parent=0 // loop_exit
    _

</llo_original>
